<compile_context>
chip_gen: v6e
topology: v6e:2x2x1
jax: 0.10.0
libtpu: 0.0.40
codegen_flags: <defaults>
</compile_context>

<pallas_src>
import functools

import numpy as np
import jax
import jax.numpy as jnp
from jax.experimental import pallas as pl
from jax.experimental.pallas import tpu as pltpu


def _round_up(a: int, m: int) -> int:
    return ((a + m - 1) // m) * m


def _choose_tile(N: int, tile_n: int, hidden: int, out_itemsize: int) -> int:
    """Lane-tile width (multiple of 128).

    Targets ~8 grid steps (so the pipeline has a steady state and both v7x
    TensorCores get >=2 iterations), keeps lanes wide (>=512 for large N,
    >=256 otherwise), and caps the tile so the double-buffered output block
    stays well under the smallest default scoped-VMEM budget (v5e: 16 MiB).
    """
    vmem_cap = (8 * 1024 * 1024) // max(1, 2 * hidden * out_itemsize)
    max_tile = min(_round_up(tile_n, 128), _round_up(N, 128),
                   max(128, (vmem_cap // 128) * 128))
    max_tile = max(max_tile, 128)
    if N <= 256:
        return min(_round_up(N, 128), max_tile)
    min_tile = min(512 if N >= 4 * 512 else 256, max_tile)
    tile = _round_up(pl.cdiv(N, 8), 128)
    tile = min(max(tile, min_tile), max_tile)
    # v7x megacore: prefer an even number of grid steps (>=2 per TensorCore)
    # when a one-notch tile adjustment achieves it within the bounds.
    g = pl.cdiv(N, tile)
    if g > 1 and g % 2 == 1:
        for cand in (tile + 128, tile - 128):
            if min_tile <= cand <= max_tile and pl.cdiv(N, cand) % 2 == 0:
                tile = cand
                break
    return tile


def magnet_kernel(x_ref, w_ref, p_ref, o_ref, *, window_dtype):
    # x_ref: (8, TN)  rows [x0, x1, 1, 0..0]
    # w_ref: (HID, 8) rows [w0, w1, bias, 0..0]
    # p_ref: (HID, 6) folded window coefficients
    # o_ref: (HID, TN)
    x = x_ref[...]                                   # (8, TN) f32

    # --- Linear2d (1x1 conv) + bias on the otherwise-idle MXU. ---
    # The sine argument is scaled by input_scale (e.g. 256), so it must keep
    # full f32 accuracy -> precision=HIGHEST (multi-pass bf16), f32 accumulate.
    lin = jnp.dot(w_ref[...], x,
                  preferred_element_type=jnp.float32,
                  precision=jax.lax.Precision.HIGHEST)
    sin_lin = jnp.sin(lin)                           # (HID, TN) f32

    # --- Rotated, gamma-scaled Gaussian window on the VPU/EUP. ---
    # cos/sin(2*pi*theta), gamma, the -0.5 factor, log2(e) and mu are all
    # folded into p_ref by the wrapper; optionally bf16 (v6e/v7x bf16 units).
    x0 = x[0:1, :].astype(window_dtype)              # (1, TN)
    x1 = x[1:2, :].astype(window_dtype)
    ca = p_ref[:, 0:1].astype(window_dtype)          # (HID, 1)
    cb = p_ref[:, 1:2].astype(window_dtype)
    cc = p_ref[:, 2:3].astype(window_dtype)
    cd = p_ref[:, 3:4].astype(window_dtype)
    u_off = p_ref[:, 4:5].astype(window_dtype)
    v_off = p_ref[:, 5:6].astype(window_dtype)
    u = ca * x0 + cb * x1 - u_off                    # implicit (HID,1)x(1,TN)
    v = cd * x1 - cc * x0 - v_off
    gauss = jnp.exp2(-(u * u + v * v))               # native EUP pow2

    o_ref[...] = (gauss.astype(jnp.float32) * sin_lin).astype(o_ref.dtype)


def magnet_forward(x, mu, gamma, theta, w_scaled, bias, *,
                   tile_n=2048, out_dtype=jnp.bfloat16, window_dtype=None):
    """x: (1, 2, H, W) float32.  Returns (1, hidden, H, W) in out_dtype."""
    _, dim_linear, H, W = x.shape
    assert dim_linear == 2, "only the steerable 2-D path is implemented"
    # TODO(synk): dim_linear=1 and non-steerable (axis-aligned Gaussian) branches
    # of MAGNetLayer are config paths not exercised by this forward.
    hidden = mu.shape[0]
    N = H * W
    out_dtype = jnp.dtype(out_dtype)
    if window_dtype is None:
        window_dtype = jnp.bfloat16 if out_dtype == jnp.bfloat16 else jnp.float32
    window_dtype = jnp.dtype(window_dtype)

    tile = _choose_tile(N, tile_n, hidden, out_dtype.itemsize)
    grid_n = pl.cdiv(N, tile)
    padded_N = grid_n * tile

    # Augmented coordinate slab: rows [x0, x1, 1, 0..0].  The ones row folds
    # the Linear2d bias into the matmul; padding the contraction dim to 8
    # keeps the MXU operand sublane-aligned.  Only this tiny input is padded
    # on the lane axis; the (hidden, N) output is written ragged (masked last
    # block), so no post-kernel slice copy of the largest array is needed.
    K_AUG = 8
    x_flat = x.reshape(dim_linear, N).astype(jnp.float32)
    x_aug = jnp.concatenate(
        [x_flat,
         jnp.ones((1, N), jnp.float32),
         jnp.zeros((K_AUG - dim_linear - 1, N), jnp.float32)], axis=0)
    if padded_N != N:
        x_aug = jnp.pad(x_aug, ((0, 0), (0, padded_N - N)))

    w_aug = jnp.concatenate(
        [w_scaled.astype(jnp.float32),
         bias.astype(jnp.float32)[:, None],
         jnp.zeros((hidden, K_AUG - dim_linear - 1), jnp.float32)], axis=1)

    # Fold rotation, gamma, the Gaussian -0.5 factor, log2(e) (for exp2) and
    # mu into per-channel coefficients:  exp(-0.5 t^2) == exp2(-(s t)^2) with
    # s = sqrt(0.5 / ln 2).
    ang = (2.0 * np.pi) * theta
    cos_t = jnp.cos(ang)[:, None]
    sin_t = jnp.sin(ang)[:, None]
    s = np.float32(np.sqrt(0.5 / np.log(2.0)))
    g0 = gamma[:, 0:1]
    g1 = gamma[:, 1:2]
    ca = s * g0 * cos_t
    cb = s * g0 * sin_t
    cc = s * g1 * sin_t
    cd = s * g1 * cos_t
    mu0 = mu[:, 0:1]
    mu1 = mu[:, 1:2]
    u_off = ca * mu0 + cb * mu1
    v_off = -cc * mu0 + cd * mu1
    params = jnp.concatenate([ca, cb, cc, cd, u_off, v_off],
                             axis=1).astype(jnp.float32)   # (hidden, 6)
    n_cols = params.shape[1]

    # VMEM budget: double-buffered output block dominates; inputs are tiny.
    est_bytes = (2 * hidden * tile * out_dtype.itemsize
                 + 2 * K_AUG * tile * 4
                 + hidden * (n_cols + K_AUG) * 4)
    vmem_limit = int(min(max(4 * est_bytes, 16 * 1024 * 1024),
                         32 * 1024 * 1024))

    cost = pl.CostEstimate(
        flops=int((12 + 2 * K_AUG) * hidden * padded_N),
        transcendentals=int(2 * hidden * padded_N),
        bytes_accessed=int(K_AUG * padded_N * 4
                           + hidden * (n_cols + K_AUG) * 4
                           + hidden * N * out_dtype.itemsize),
    )

    kernel = functools.partial(magnet_kernel, window_dtype=window_dtype)
    out_flat = pl.pallas_call(
        kernel,
        out_shape=jax.ShapeDtypeStruct((hidden, N), out_dtype),
        grid=(grid_n,),
        in_specs=[
            pl.BlockSpec((K_AUG, tile), lambda i: (0, i)),
            pl.BlockSpec((hidden, K_AUG), lambda i: (0, 0)),
            pl.BlockSpec((hidden, n_cols), lambda i: (0, 0)),
        ],
        out_specs=pl.BlockSpec((hidden, tile), lambda i: (0, i)),
        compiler_params=pltpu.CompilerParams(
            dimension_semantics=("parallel",),
            vmem_limit_bytes=vmem_limit,
        ),
        cost_estimate=cost,
    )(x_aug, w_aug, params)

    return out_flat.reshape(1, hidden, H, W)


def magnet_reference(x, mu, gamma, theta, w_scaled, bias):
    """Pure-JAX reference mirroring the PyTorch forward (batch=1)."""
    ang = 2.0 * np.pi * theta
    cos_t = jnp.cos(ang)[None, :, None, None]
    sin_t = jnp.sin(ang)[None, :, None, None]
    d = x[:, None, :, :, :] - mu[None, :, :, None, None]      # (1, hid, 2, H, W)
    r0 = cos_t * d[:, :, 0] + sin_t * d[:, :, 1]
    r1 = -sin_t * d[:, :, 0] + cos_t * d[:, :, 1]
    gauss = jnp.exp(
        -0.5 * ((gamma[None, :, 0, None, None] * r0) ** 2
                + (gamma[None, :, 1, None, None] * r1) ** 2)
    )
    lin = jnp.einsum("hd,bdxy->bhxy", w_scaled, x,
                     precision=jax.lax.Precision.HIGHEST) \
        + bias[None, :, None, None]
    return gauss * jnp.sin(lin)


if __name__ == "__main__":
    # Module hyper-params (dim_linear=2, steerable=True)
    dim_linear = 2
    hidden_channels = 32
    input_scale = 256.0
    alpha, beta = 6.0, 1.0
    init_spatial_value = 1.0

    key = jax.random.PRNGKey(0)
    k_x1, k_x2, k_x3, k_mu, k_gamma, k_theta, k_w, k_b = jax.random.split(key, 8)

    # Deterministic "parameters" matching __init__ shapes / distributions.
    mu = init_spatial_value * (
        2.0 * jax.random.uniform(k_mu, (hidden_channels, dim_linear)) - 1.0
    )
    gamma = jax.random.gamma(k_gamma, alpha, (hidden_channels, dim_linear)) / beta
    theta = jax.random.uniform(k_theta, (hidden_channels,))
    # Linear2d (1x1 conv) weight, then the in-place init-time scaling:
    #   weight *= input_scale * gamma
    w_raw = 0.1 * jax.random.normal(k_w, (hidden_channels, dim_linear))
    w_scaled = w_raw * input_scale * gamma
    bias = jax.random.uniform(
        k_b, (hidden_channels,), minval=-np.pi, maxval=np.pi
    )

    # Case 1: divisible H*W, single block, f32 output + f32 window (tight).
    H, W = 16, 16
    x1 = jax.random.uniform(k_x1, (1, dim_linear, H, W), minval=-1.0, maxval=1.0)
    out1 = jax.block_until_ready(
        magnet_forward(x1, mu, gamma, theta, w_scaled, bias,
                       out_dtype=jnp.float32, window_dtype=jnp.float32))
    ref1 = magnet_reference(x1, mu, gamma, theta, w_scaled, bias)
    np.testing.assert_allclose(np.asarray(out1), np.asarray(ref1),
                               rtol=2e-3, atol=2e-3)

    # Case 2: ragged H*W (masked last output block), f32 path (tight).
    H2, W2 = 17, 19
    x2 = jax.random.uniform(k_x2, (1, dim_linear, H2, W2), minval=-1.0, maxval=1.0)
    out2 = jax.block_until_ready(
        magnet_forward(x2, mu, gamma, theta, w_scaled, bias,
                       out_dtype=jnp.float32, window_dtype=jnp.float32))
    ref2 = magnet_reference(x2, mu, gamma, theta, w_scaled, bias)
    np.testing.assert_allclose(np.asarray(out2), np.asarray(ref2),
                               rtol=2e-3, atol=2e-3)

    # Case 3: multi-step grid, default bf16 output + bf16 window path.
    # Loose sanity tolerance: bf16 rounding of the gamma-scaled (O(10)) window
    # terms propagated through exp gives worst-case absolute errors of a few
    # 1e-2 near the Gaussian shoulder; this check only guards against gross
    # (phase / sign / masking) errors, the f32 cases above are the tight ones.
    H3, W3 = 32, 32
    x3 = jax.random.uniform(k_x3, (1, dim_linear, H3, W3), minval=-1.0, maxval=1.0)
    out3 = jax.block_until_ready(
        magnet_forward(x3, mu, gamma, theta, w_scaled, bias))   # defaults: bf16
    ref3 = magnet_reference(x3, mu, gamma, theta, w_scaled, bias)
    out3_f32 = np.asarray(out3, dtype=np.float32)
    assert np.all(np.isfinite(out3_f32))
    np.testing.assert_allclose(out3_f32, np.asarray(ref3), rtol=1e-1, atol=1e-1)

    print("KERNEL_OK")
</pallas_src>

<mosaic_0001>
module attributes {stable_mosaic.version = 11 : i64} {
  func.func @magnet_kernel(%arg0: i32, %arg1: memref<8x256xf32, #tpu.memory_space<vmem>>, %arg2: memref<32x8xf32, #tpu.memory_space<vmem>>, %arg3: memref<32x6xf32, #tpu.memory_space<vmem>>, %arg4: memref<32x256xf32, #tpu.memory_space<vmem>>) attributes {dimension_semantics = [#tpu.dimension_semantics<parallel>], iteration_bounds = array<i64: 1>, scalar_prefetch = 0 : i64, scratch_operands = 0 : i64, tpu.core_type = #tpu.core_type<tc>, window_params = [{transform_indices = @transform_0, window_bounds = array<i64: 8, 256>}, {pipeline_mode = #tpu.pipeline_mode<synchronous>, transform_indices = @transform_1, window_bounds = array<i64: 32, 8>}, {pipeline_mode = #tpu.pipeline_mode<synchronous>, transform_indices = @transform_2, window_bounds = array<i64: 32, 6>}, {transform_indices = @transform_3, window_bounds = array<i64: 32, 256>}]} {
    %c0 = arith.constant 0 : index
    %c0_0 = arith.constant 0 : index
    %0 = vector.load %arg1[%c0, %c0_0] : memref<8x256xf32, #tpu.memory_space<vmem>>, vector<8x256xf32>
    %c0_1 = arith.constant 0 : index
    %c0_2 = arith.constant 0 : index
    %1 = vector.load %arg2[%c0_1, %c0_2] : memref<32x8xf32, #tpu.memory_space<vmem>>, vector<32x8xf32>
    %cst = arith.constant dense<0.000000e+00> : vector<32x256xf32>
    %2 = tpu.matmul %1, %0, %cst {dimension_numbers = #tpu.dot_dimension_numbers<[1], [0], [0], [1], [0, 0, 1, 1], [], []>, precision = #tpu.contract_precision<fp32>} : vector<32x8xf32>, vector<8x256xf32>, vector<32x256xf32> -> vector<32x256xf32>
    %3 = math.sin %2 : vector<32x256xf32>
    %4 = vector.extract_strided_slice %0 {offsets = [0, 0], sizes = [1, 256], strides = [1, 1]} : vector<8x256xf32> to vector<1x256xf32>
    %5 = vector.extract_strided_slice %0 {offsets = [1, 0], sizes = [1, 256], strides = [1, 1]} : vector<8x256xf32> to vector<1x256xf32>
    %c0_3 = arith.constant 0 : index
    %c0_4 = arith.constant 0 : index
    %6 = vector.load %arg3[%c0_3, %c0_4] : memref<32x6xf32, #tpu.memory_space<vmem>>, vector<32x1xf32>
    %c0_5 = arith.constant 0 : index
    %c1 = arith.constant 1 : index
    %7 = vector.load %arg3[%c0_5, %c1] : memref<32x6xf32, #tpu.memory_space<vmem>>, vector<32x1xf32>
    %c0_6 = arith.constant 0 : index
    %c2 = arith.constant 2 : index
    %8 = vector.load %arg3[%c0_6, %c2] : memref<32x6xf32, #tpu.memory_space<vmem>>, vector<32x1xf32>
    %c0_7 = arith.constant 0 : index
    %c3 = arith.constant 3 : index
    %9 = vector.load %arg3[%c0_7, %c3] : memref<32x6xf32, #tpu.memory_space<vmem>>, vector<32x1xf32>
    %c0_8 = arith.constant 0 : index
    %c4 = arith.constant 4 : index
    %10 = vector.load %arg3[%c0_8, %c4] : memref<32x6xf32, #tpu.memory_space<vmem>>, vector<32x1xf32>
    %c0_9 = arith.constant 0 : index
    %c5 = arith.constant 5 : index
    %11 = vector.load %arg3[%c0_9, %c5] : memref<32x6xf32, #tpu.memory_space<vmem>>, vector<32x1xf32>
    %12 = vector.broadcast %6 : vector<32x1xf32> to vector<32x256xf32>
    %13 = vector.broadcast %4 : vector<1x256xf32> to vector<32x256xf32>
    %14 = arith.mulf %12, %13 : vector<32x256xf32>
    %15 = vector.broadcast %7 : vector<32x1xf32> to vector<32x256xf32>
    %16 = vector.broadcast %5 : vector<1x256xf32> to vector<32x256xf32>
    %17 = arith.mulf %15, %16 : vector<32x256xf32>
    %18 = arith.addf %14, %17 : vector<32x256xf32>
    %19 = vector.broadcast %10 : vector<32x1xf32> to vector<32x256xf32>
    %20 = arith.subf %18, %19 : vector<32x256xf32>
    %21 = vector.broadcast %9 : vector<32x1xf32> to vector<32x256xf32>
    %22 = vector.broadcast %5 : vector<1x256xf32> to vector<32x256xf32>
    %23 = arith.mulf %21, %22 : vector<32x256xf32>
    %24 = vector.broadcast %8 : vector<32x1xf32> to vector<32x256xf32>
    %25 = vector.broadcast %4 : vector<1x256xf32> to vector<32x256xf32>
    %26 = arith.mulf %24, %25 : vector<32x256xf32>
    %27 = arith.subf %23, %26 : vector<32x256xf32>
    %28 = vector.broadcast %11 : vector<32x1xf32> to vector<32x256xf32>
    %29 = arith.subf %27, %28 : vector<32x256xf32>
    %30 = arith.mulf %20, %20 : vector<32x256xf32>
    %31 = arith.mulf %29, %29 : vector<32x256xf32>
    %32 = arith.addf %30, %31 : vector<32x256xf32>
    %cst_10 = arith.constant 0.000000e+00 : f32
    %33 = vector.broadcast %cst_10 : f32 to vector<32x256xf32>
    %34 = arith.subf %33, %32 : vector<32x256xf32>
    %35 = math.exp2 %34 : vector<32x256xf32>
    %36 = arith.mulf %35, %3 : vector<32x256xf32>
    %c0_11 = arith.constant 0 : index
    %c0_12 = arith.constant 0 : index
    %37 = vector.load %arg4[%c0_11, %c0_12] : memref<32x256xf32, #tpu.memory_space<vmem>>, vector<32x256xf32>
    tpu.vector_store %arg4[%c0_11, %c0_12], %36 {strides = array<i32>} : memref<32x256xf32, #tpu.memory_space<vmem>>, vector<32x256xf32>,
    return
  }
  func.func @transform_0(%arg0: i32) -> (i32, i32) {
    %c0_i32 = arith.constant 0 : i32
    %c0_i32_0 = arith.constant 0 : i32
    return %c0_i32, %arg0 : i32, i32
  }
  func.func @transform_1(%arg0: i32) -> (i32, i32) {
    %c0_i32 = arith.constant 0 : i32
    %c0_i32_0 = arith.constant 0 : i32
    %c0_i32_1 = arith.constant 0 : i32
    return %c0_i32, %c0_i32_0 : i32, i32
  }
  func.func @transform_2(%arg0: i32) -> (i32, i32) {
    %c0_i32 = arith.constant 0 : i32
    %c0_i32_0 = arith.constant 0 : i32
    %c0_i32_1 = arith.constant 0 : i32
    return %c0_i32, %c0_i32_0 : i32, i32
  }
  func.func @transform_3(%arg0: i32) -> (i32, i32) {
    %c0_i32 = arith.constant 0 : i32
    %c0_i32_0 = arith.constant 0 : i32
    return %c0_i32, %arg0 : i32, i32
  }
}

</mosaic_0001>

<llo_original>
// kernel: tpu_custom_call.1
$region0: #{tpu_custom_call.1}
  #allocation0 [shape = 'u32[]', space=smem, size = 0x4, offset = 0x4, fixed_abs, tag = 'smem constant byte address 0x4 - core index']
  #allocation1 [shape = 'u32[144,128]{1,0:T(1,128)}', space=vmem, size = 0x12000, scoped, tag = 'internal scratch']
  %s0 = inlined_call_operand.vmem [shape: f32[8,256], index: 0, kind: input, shape index: {}]
  %s1 = inlined_call_operand.vmem [shape: f32[32,8], index: 1, kind: input, shape index: {}]
  %s2 = inlined_call_operand.vmem [shape: f32[32,6], index: 2, kind: input, shape index: {}]
  %s3 = inlined_call_operand.hbm [shape: f32[32,256], index: 3, kind: output, shape index: {}]
  %s4 = sld [smem:[#allocation0]]
  $region22: #{tpu_custom_call.1} parent=0
    _
  %s6 = ssub.s32 1, %s4
  %s7 = scalar_select 0, %s6, %s4
  $region1: #{tpu_custom_call.1} parent=0
    #allocation2 [shape = 'u8[32768]{0}', space=vmem, size = 0x8000, scoped, tag = 'output window, operand 0, single buffered']
    #allocation3 [shape = 's32[1]{0}', space=sflag, size = 0x4, scoped, tag = 'scoped memory for tpu_custom_call.1']
    %8 = vsyncpa [#allocation3], 0
    // Predicated region
    $region2: #{tpu_custom_call.1} parent=1 // pred_check
      _
    $region3: #{tpu_custom_call.1} parent=1 // pred_check_branch
      %10 = sbr.rel (0) target = $region5
    $region4: #{tpu_custom_call.1} parent=1 // pred_region
      _
    $region5: #{tpu_custom_call.1} parent=1 // pred_fallthru
      _
    // Predicated region
    $region6: #{tpu_custom_call.1} parent=1 // pred_check
      _
    $region7: #{tpu_custom_call.1} parent=1 // pred_check_branch
      %12 = sbr.rel (0) target = $region9
    $region8: #{tpu_custom_call.1} parent=1 // pred_region
      _
    $region9: #{tpu_custom_call.1} parent=1 // pred_fallthru
      _
    // Predicated region
    $region10: #{tpu_custom_call.1} parent=1 // pred_check
      _
    $region11: #{tpu_custom_call.1} parent=1 // pred_check_branch
      %14 = sbr.rel (0) target = $region13
    $region12: #{tpu_custom_call.1} parent=1 // pred_region
      _
    $region13: #{tpu_custom_call.1} parent=1 // pred_fallthru
      _
    %v15 = vld [vmem:[%s0] sm:$0xff]
    %v16 = vld [vmem:[%s0 + $0x8] sm:$0xff]
    %v17 = vld [vmem:[%s1] sm:$0xff]
    %v18 = vld [vmem:[%s1 + $0x8] sm:$0xff]
    %v19 = vld [vmem:[%s1 + $0x10] sm:$0xff]
    %v20 = vld [vmem:[%s1 + $0x18] sm:$0xff]
    %vm21 = vcmask 64512
    %v23 = vsel %vm21, %v17, 0
    %v26 = vsel %vm21, %v18, 0
    %v29 = vsel %vm21, %v19, 0
    %v32 = vsel %vm21, %v20, 0
    %34 = vmatprep.subr.mxu0 0.0
    %35 = vmatpush1.msra.mxu0 0.0
    %36 = vmatprep.subr.mxu0 0.0
    %37 = vmatpush1.msra.mxu0 0.0
    %38 = vmatprep.subr.mxu0 0.0
    %39 = vmatpush1.msra.mxu0 0.0
    %40 = vmatprep.subr.mxu0 0.0
    %41 = vmatpush1.msra.mxu0 0.0
    %42 = vmatprep.subr.mxu0 0.0
    %43 = vmatpush1.msra.mxu0 0.0
    %44 = vmatprep.subr.mxu0 0.0
    %45 = vmatpush1.msra.mxu0 0.0
    %46 = vmatprep.subr.mxu0 0.0
    %47 = vmatpush1.msra.mxu0 0.0
    %48 = vmatprep.subr.mxu0 0.0
    %49 = vmatpush1.msra.mxu0 0.0
    %50 = vmatprep.subr.mxu0 0.0
    %51 = vmatpush1.msra.mxu0 0.0
    %52 = vmatprep.subr.mxu0 0.0
    %53 = vmatpush1.msra.mxu0 0.0
    %54 = vmatprep.subr.mxu0 0.0
    %55 = vmatpush1.msra.mxu0 0.0
    %56 = vmatprep.subr.mxu0 0.0
    %57 = vmatpush1.msra.mxu0 0.0
    %58 = vmatprep.subr.mxu0 0.0
    %59 = vmatpush1.msra.mxu0 0.0
    %60 = vmatprep.subr.mxu0 0.0
    %61 = vmatpush1.msra.mxu0 0.0
    %62 = vmatprep.subr.mxu0 0.0
    %63 = vmatpush1.msra.mxu0 0.0
    %v64 = vand.u32 %v16, 4294901760
    %65 = vmatprep.subr.mxu0 %v64
    %v66 = vand.u32 %v15, 4294901760
    %67 = vmatpush1.msra.mxu0 %v66
    %68 = vmatprep.subr.mxu0 0.0
    %69 = vmatpush2.msra.mxu0 0.0
    %70 = vmatprep.subr.mxu0 0.0
    %71 = vmatpush2.msra.mxu0 0.0
    %72 = vmatprep.subr.mxu0 0.0
    %73 = vmatpush2.msra.mxu0 0.0
    %74 = vmatprep.subr.mxu0 0.0
    %75 = vmatpush2.msra.mxu0 0.0
    %76 = vmatprep.subr.mxu0 0.0
    %77 = vmatpush2.msra.mxu0 0.0
    %78 = vmatprep.subr.mxu0 0.0
    %79 = vmatpush2.msra.mxu0 0.0
    %80 = vmatprep.subr.mxu0 0.0
    %81 = vmatpush2.msra.mxu0 0.0
    %82 = vmatprep.subr.mxu0 0.0
    %83 = vmatpush2.msra.mxu0 0.0
    %84 = vmatprep.subr.mxu0 0.0
    %85 = vmatpush2.msra.mxu0 0.0
    %86 = vmatprep.subr.mxu0 0.0
    %87 = vmatpush2.msra.mxu0 0.0
    %88 = vmatprep.subr.mxu0 0.0
    %89 = vmatpush2.msra.mxu0 0.0
    %90 = vmatprep.subr.mxu0 0.0
    %91 = vmatpush2.msra.mxu0 0.0
    %92 = vmatprep.subr.mxu0 0.0
    %93 = vmatpush2.msra.mxu0 0.0
    %94 = vmatprep.subr.mxu0 0.0
    %95 = vmatpush2.msra.mxu0 0.0
    %96 = vmatprep.subr.mxu0 0.0
    %97 = vmatpush2.msra.mxu0 0.0
    %98 = vmatprep.subr.mxu0 0.0
    %99 = vmatpush2.msra.mxu0 0.0
    %100 = vmatprep.mubr.f32.mxu0 0.0
    %v101 = vand.u32 %v23, 4294901760
    %v102 = vsub.f32 %v23, %v101
    %v103 = vand.u32 %v102, 4294901760
    %v104 = vsub.f32 %v102, %v103
    %v105 = vand.u32 %v104, 4294901760
    %106 = vmatmul.mubr.f32.gmra.mxu0 %v105
    %v107 = vpop.f32.mrf.mxu0
    %v108 = vadd.f32 0.0, %v107
    %v109 = vpop.f32.mrf.mxu0
    %v110 = vadd.f32 0.0, %v109
    %111 = vmatprep.mubr.f32.mxu0 0.0
    %v112 = vand.u32 %v26, 4294901760
    %v113 = vsub.f32 %v26, %v112
    %v114 = vand.u32 %v113, 4294901760
    %v115 = vsub.f32 %v113, %v114
    %v116 = vand.u32 %v115, 4294901760
    %117 = vmatmul.mubr.f32.gmra.mxu0 %v116
    %v118 = vpop.f32.mrf.mxu0
    %v119 = vadd.f32 0.0, %v118
    %v120 = vpop.f32.mrf.mxu0
    %v121 = vadd.f32 0.0, %v120
    %122 = vmatprep.mubr.f32.mxu0 0.0
    %v123 = vand.u32 %v29, 4294901760
    %v124 = vsub.f32 %v29, %v123
    %v125 = vand.u32 %v124, 4294901760
    %v126 = vsub.f32 %v124, %v125
    %v127 = vand.u32 %v126, 4294901760
    %128 = vmatmul.mubr.f32.gmra.mxu0 %v127
    %v129 = vpop.f32.mrf.mxu0
    %v130 = vadd.f32 0.0, %v129
    %v131 = vpop.f32.mrf.mxu0
    %v132 = vadd.f32 0.0, %v131
    %133 = vmatprep.mubr.f32.mxu0 0.0
    %v134 = vand.u32 %v32, 4294901760
    %v135 = vsub.f32 %v32, %v134
    %v136 = vand.u32 %v135, 4294901760
    %v137 = vsub.f32 %v135, %v136
    %v138 = vand.u32 %v137, 4294901760
    %139 = vmatmul.mubr.f32.gmra.mxu0 %v138
    %v140 = vpop.f32.mrf.mxu0
    %v141 = vadd.f32 0.0, %v140
    %v142 = vpop.f32.mrf.mxu0
    %v143 = vadd.f32 0.0, %v142
    %144 = vdwg.mxu0
    %145 = vmatprep.subr.mxu0 0.0
    %146 = vmatpush1.msra.mxu0 0.0
    %147 = vmatprep.subr.mxu0 0.0
    %148 = vmatpush1.msra.mxu0 0.0
    %149 = vmatprep.subr.mxu0 0.0
    %150 = vmatpush1.msra.mxu0 0.0
    %151 = vmatprep.subr.mxu0 0.0
    %152 = vmatpush1.msra.mxu0 0.0
    %153 = vmatprep.subr.mxu0 0.0
    %154 = vmatpush1.msra.mxu0 0.0
    %155 = vmatprep.subr.mxu0 0.0
    %156 = vmatpush1.msra.mxu0 0.0
    %157 = vmatprep.subr.mxu0 0.0
    %158 = vmatpush1.msra.mxu0 0.0
    %159 = vmatprep.subr.mxu0 0.0
    %160 = vmatpush1.msra.mxu0 0.0
    %161 = vmatprep.subr.mxu0 0.0
    %162 = vmatpush1.msra.mxu0 0.0
    %163 = vmatprep.subr.mxu0 0.0
    %164 = vmatpush1.msra.mxu0 0.0
    %165 = vmatprep.subr.mxu0 0.0
    %166 = vmatpush1.msra.mxu0 0.0
    %167 = vmatprep.subr.mxu0 0.0
    %168 = vmatpush1.msra.mxu0 0.0
    %169 = vmatprep.subr.mxu0 0.0
    %170 = vmatpush1.msra.mxu0 0.0
    %171 = vmatprep.subr.mxu0 0.0
    %172 = vmatpush1.msra.mxu0 0.0
    %173 = vmatprep.subr.mxu0 0.0
    %174 = vmatpush1.msra.mxu0 0.0
    %v175 = vand.u32 %v16, 4294901760
    %v176 = vsub.f32 %v16, %v175
    %v177 = vand.u32 %v176, 4294901760
    %v178 = vsub.f32 %v176, %v177
    %v179 = vand.u32 %v178, 4294901760
    %180 = vmatprep.subr.mxu0 %v179
    %v181 = vand.u32 %v15, 4294901760
    %v182 = vsub.f32 %v15, %v181
    %v183 = vand.u32 %v182, 4294901760
    %v184 = vsub.f32 %v182, %v183
    %v185 = vand.u32 %v184, 4294901760
    %186 = vmatpush1.msra.mxu0 %v185
    %187 = vmatprep.subr.mxu0 0.0
    %188 = vmatpush2.msra.mxu0 0.0
    %189 = vmatprep.subr.mxu0 0.0
    %190 = vmatpush2.msra.mxu0 0.0
    %191 = vmatprep.subr.mxu0 0.0
    %192 = vmatpush2.msra.mxu0 0.0
    %193 = vmatprep.subr.mxu0 0.0
    %194 = vmatpush2.msra.mxu0 0.0
    %195 = vmatprep.subr.mxu0 0.0
    %196 = vmatpush2.msra.mxu0 0.0
    %197 = vmatprep.subr.mxu0 0.0
    %198 = vmatpush2.msra.mxu0 0.0
    %199 = vmatprep.subr.mxu0 0.0
    %200 = vmatpush2.msra.mxu0 0.0
    %201 = vmatprep.subr.mxu0 0.0
    %202 = vmatpush2.msra.mxu0 0.0
    %203 = vmatprep.subr.mxu0 0.0
    %204 = vmatpush2.msra.mxu0 0.0
    %205 = vmatprep.subr.mxu0 0.0
    %206 = vmatpush2.msra.mxu0 0.0
    %207 = vmatprep.subr.mxu0 0.0
    %208 = vmatpush2.msra.mxu0 0.0
    %209 = vmatprep.subr.mxu0 0.0
    %210 = vmatpush2.msra.mxu0 0.0
    %211 = vmatprep.subr.mxu0 0.0
    %212 = vmatpush2.msra.mxu0 0.0
    %213 = vmatprep.subr.mxu0 0.0
    %214 = vmatpush2.msra.mxu0 0.0
    %215 = vmatprep.subr.mxu0 0.0
    %216 = vmatpush2.msra.mxu0 0.0
    %217 = vmatprep.subr.mxu0 0.0
    %218 = vmatpush2.msra.mxu0 0.0
    %219 = vmatprep.mubr.f32.mxu0 0.0
    %v220 = vand.u32 %v23, 4294901760
    %221 = vmatmul.mubr.f32.gmra.mxu0 %v220
    %v222 = vpop.f32.mrf.mxu0
    %v223 = vadd.f32 %v108, %v222
    %v224 = vpop.f32.mrf.mxu0
    %v225 = vadd.f32 %v110, %v224
    %226 = vmatprep.mubr.f32.mxu0 0.0
    %v227 = vand.u32 %v26, 4294901760
    %228 = vmatmul.mubr.f32.gmra.mxu0 %v227
    %v229 = vpop.f32.mrf.mxu0
    %v230 = vadd.f32 %v119, %v229
    %v231 = vpop.f32.mrf.mxu0
    %v232 = vadd.f32 %v121, %v231
    %233 = vmatprep.mubr.f32.mxu0 0.0
    %v234 = vand.u32 %v29, 4294901760
    %235 = vmatmul.mubr.f32.gmra.mxu0 %v234
    %v236 = vpop.f32.mrf.mxu0
    %v237 = vadd.f32 %v130, %v236
    %v238 = vpop.f32.mrf.mxu0
    %v239 = vadd.f32 %v132, %v238
    %240 = vmatprep.mubr.f32.mxu0 0.0
    %v241 = vand.u32 %v32, 4294901760
    %242 = vmatmul.mubr.f32.gmra.mxu0 %v241
    %v243 = vpop.f32.mrf.mxu0
    %v244 = vadd.f32 %v141, %v243
    %v245 = vpop.f32.mrf.mxu0
    %v246 = vadd.f32 %v143, %v245
    %247 = vdwg.mxu0
    %248 = vmatprep.subr.mxu0 0.0
    %249 = vmatpush1.msra.mxu0 0.0
    %250 = vmatprep.subr.mxu0 0.0
    %251 = vmatpush1.msra.mxu0 0.0
    %252 = vmatprep.subr.mxu0 0.0
    %253 = vmatpush1.msra.mxu0 0.0
    %254 = vmatprep.subr.mxu0 0.0
    %255 = vmatpush1.msra.mxu0 0.0
    %256 = vmatprep.subr.mxu0 0.0
    %257 = vmatpush1.msra.mxu0 0.0
    %258 = vmatprep.subr.mxu0 0.0
    %259 = vmatpush1.msra.mxu0 0.0
    %260 = vmatprep.subr.mxu0 0.0
    %261 = vmatpush1.msra.mxu0 0.0
    %262 = vmatprep.subr.mxu0 0.0
    %263 = vmatpush1.msra.mxu0 0.0
    %264 = vmatprep.subr.mxu0 0.0
    %265 = vmatpush1.msra.mxu0 0.0
    %266 = vmatprep.subr.mxu0 0.0
    %267 = vmatpush1.msra.mxu0 0.0
    %268 = vmatprep.subr.mxu0 0.0
    %269 = vmatpush1.msra.mxu0 0.0
    %270 = vmatprep.subr.mxu0 0.0
    %271 = vmatpush1.msra.mxu0 0.0
    %272 = vmatprep.subr.mxu0 0.0
    %273 = vmatpush1.msra.mxu0 0.0
    %274 = vmatprep.subr.mxu0 0.0
    %275 = vmatpush1.msra.mxu0 0.0
    %276 = vmatprep.subr.mxu0 0.0
    %277 = vmatpush1.msra.mxu0 0.0
    %v278 = vand.u32 %v16, 4294901760
    %v279 = vsub.f32 %v16, %v278
    %280 = vmatprep.subr.mxu0 %v279
    %v281 = vand.u32 %v15, 4294901760
    %v282 = vsub.f32 %v15, %v281
    %283 = vmatpush1.msra.mxu0 %v282
    %284 = vmatprep.subr.mxu0 0.0
    %285 = vmatpush2.msra.mxu0 0.0
    %286 = vmatprep.subr.mxu0 0.0
    %287 = vmatpush2.msra.mxu0 0.0
    %288 = vmatprep.subr.mxu0 0.0
    %289 = vmatpush2.msra.mxu0 0.0
    %290 = vmatprep.subr.mxu0 0.0
    %291 = vmatpush2.msra.mxu0 0.0
    %292 = vmatprep.subr.mxu0 0.0
    %293 = vmatpush2.msra.mxu0 0.0
    %294 = vmatprep.subr.mxu0 0.0
    %295 = vmatpush2.msra.mxu0 0.0
    %296 = vmatprep.subr.mxu0 0.0
    %297 = vmatpush2.msra.mxu0 0.0
    %298 = vmatprep.subr.mxu0 0.0
    %299 = vmatpush2.msra.mxu0 0.0
    %300 = vmatprep.subr.mxu0 0.0
    %301 = vmatpush2.msra.mxu0 0.0
    %302 = vmatprep.subr.mxu0 0.0
    %303 = vmatpush2.msra.mxu0 0.0
    %304 = vmatprep.subr.mxu0 0.0
    %305 = vmatpush2.msra.mxu0 0.0
    %306 = vmatprep.subr.mxu0 0.0
    %307 = vmatpush2.msra.mxu0 0.0
    %308 = vmatprep.subr.mxu0 0.0
    %309 = vmatpush2.msra.mxu0 0.0
    %310 = vmatprep.subr.mxu0 0.0
    %311 = vmatpush2.msra.mxu0 0.0
    %312 = vmatprep.subr.mxu0 0.0
    %313 = vmatpush2.msra.mxu0 0.0
    %314 = vmatprep.subr.mxu0 0.0
    %315 = vmatpush2.msra.mxu0 0.0
    %316 = vmatprep.mubr.f32.mxu0 0.0
    %v317 = vand.u32 %v23, 4294901760
    %v318 = vsub.f32 %v23, %v317
    %319 = vmatmul.mubr.f32.gmra.mxu0 %v318
    %v320 = vpop.f32.mrf.mxu0
    %v321 = vadd.f32 %v223, %v320
    %v322 = vpop.f32.mrf.mxu0
    %v323 = vadd.f32 %v225, %v322
    %324 = vmatprep.mubr.f32.mxu0 0.0
    %v325 = vand.u32 %v26, 4294901760
    %v326 = vsub.f32 %v26, %v325
    %327 = vmatmul.mubr.f32.gmra.mxu0 %v326
    %v328 = vpop.f32.mrf.mxu0
    %v329 = vadd.f32 %v230, %v328
    %v330 = vpop.f32.mrf.mxu0
    %v331 = vadd.f32 %v232, %v330
    %332 = vmatprep.mubr.f32.mxu0 0.0
    %v333 = vand.u32 %v29, 4294901760
    %v334 = vsub.f32 %v29, %v333
    %335 = vmatmul.mubr.f32.gmra.mxu0 %v334
    %v336 = vpop.f32.mrf.mxu0
    %v337 = vadd.f32 %v237, %v336
    %v338 = vpop.f32.mrf.mxu0
    %v339 = vadd.f32 %v239, %v338
    %340 = vmatprep.mubr.f32.mxu0 0.0
    %v341 = vand.u32 %v32, 4294901760
    %v342 = vsub.f32 %v32, %v341
    %343 = vmatmul.mubr.f32.gmra.mxu0 %v342
    %v344 = vpop.f32.mrf.mxu0
    %v345 = vadd.f32 %v244, %v344
    %v346 = vpop.f32.mrf.mxu0
    %v347 = vadd.f32 %v246, %v346
    %348 = vdwg.mxu0
    %349 = vmatprep.subr.mxu0 0.0
    %350 = vmatpush1.msra.mxu0 0.0
    %351 = vmatprep.subr.mxu0 0.0
    %352 = vmatpush1.msra.mxu0 0.0
    %353 = vmatprep.subr.mxu0 0.0
    %354 = vmatpush1.msra.mxu0 0.0
    %355 = vmatprep.subr.mxu0 0.0
    %356 = vmatpush1.msra.mxu0 0.0
    %357 = vmatprep.subr.mxu0 0.0
    %358 = vmatpush1.msra.mxu0 0.0
    %359 = vmatprep.subr.mxu0 0.0
    %360 = vmatpush1.msra.mxu0 0.0
    %361 = vmatprep.subr.mxu0 0.0
    %362 = vmatpush1.msra.mxu0 0.0
    %363 = vmatprep.subr.mxu0 0.0
    %364 = vmatpush1.msra.mxu0 0.0
    %365 = vmatprep.subr.mxu0 0.0
    %366 = vmatpush1.msra.mxu0 0.0
    %367 = vmatprep.subr.mxu0 0.0
    %368 = vmatpush1.msra.mxu0 0.0
    %369 = vmatprep.subr.mxu0 0.0
    %370 = vmatpush1.msra.mxu0 0.0
    %371 = vmatprep.subr.mxu0 0.0
    %372 = vmatpush1.msra.mxu0 0.0
    %373 = vmatprep.subr.mxu0 0.0
    %374 = vmatpush1.msra.mxu0 0.0
    %375 = vmatprep.subr.mxu0 0.0
    %376 = vmatpush1.msra.mxu0 0.0
    %377 = vmatprep.subr.mxu0 0.0
    %378 = vmatpush1.msra.mxu0 0.0
    %v379 = vand.u32 %v16, 4294901760
    %380 = vmatprep.subr.mxu0 %v379
    %v381 = vand.u32 %v15, 4294901760
    %382 = vmatpush1.msra.mxu0 %v381
    %383 = vmatprep.subr.mxu0 0.0
    %384 = vmatpush2.msra.mxu0 0.0
    %385 = vmatprep.subr.mxu0 0.0
    %386 = vmatpush2.msra.mxu0 0.0
    %387 = vmatprep.subr.mxu0 0.0
    %388 = vmatpush2.msra.mxu0 0.0
    %389 = vmatprep.subr.mxu0 0.0
    %390 = vmatpush2.msra.mxu0 0.0
    %391 = vmatprep.subr.mxu0 0.0
    %392 = vmatpush2.msra.mxu0 0.0
    %393 = vmatprep.subr.mxu0 0.0
    %394 = vmatpush2.msra.mxu0 0.0
    %395 = vmatprep.subr.mxu0 0.0
    %396 = vmatpush2.msra.mxu0 0.0
    %397 = vmatprep.subr.mxu0 0.0
    %398 = vmatpush2.msra.mxu0 0.0
    %399 = vmatprep.subr.mxu0 0.0
    %400 = vmatpush2.msra.mxu0 0.0
    %401 = vmatprep.subr.mxu0 0.0
    %402 = vmatpush2.msra.mxu0 0.0
    %403 = vmatprep.subr.mxu0 0.0
    %404 = vmatpush2.msra.mxu0 0.0
    %405 = vmatprep.subr.mxu0 0.0
    %406 = vmatpush2.msra.mxu0 0.0
    %407 = vmatprep.subr.mxu0 0.0
    %408 = vmatpush2.msra.mxu0 0.0
    %409 = vmatprep.subr.mxu0 0.0
    %410 = vmatpush2.msra.mxu0 0.0
    %411 = vmatprep.subr.mxu0 0.0
    %412 = vmatpush2.msra.mxu0 0.0
    %413 = vmatprep.subr.mxu0 0.0
    %414 = vmatpush2.msra.mxu0 0.0
    %415 = vmatprep.mubr.f32.mxu0 0.0
    %v416 = vand.u32 %v23, 4294901760
    %v417 = vsub.f32 %v23, %v416
    %v418 = vand.u32 %v417, 4294901760
    %419 = vmatmul.mubr.f32.gmra.mxu0 %v418
    %v420 = vpop.f32.mrf.mxu0
    %v421 = vadd.f32 %v321, %v420
    %v422 = vpop.f32.mrf.mxu0
    %v423 = vadd.f32 %v323, %v422
    %424 = vmatprep.mubr.f32.mxu0 0.0
    %v425 = vand.u32 %v26, 4294901760
    %v426 = vsub.f32 %v26, %v425
    %v427 = vand.u32 %v426, 4294901760
    %428 = vmatmul.mubr.f32.gmra.mxu0 %v427
    %v429 = vpop.f32.mrf.mxu0
    %v430 = vadd.f32 %v329, %v429
    %v431 = vpop.f32.mrf.mxu0
    %v432 = vadd.f32 %v331, %v431
    %433 = vmatprep.mubr.f32.mxu0 0.0
    %v434 = vand.u32 %v29, 4294901760
    %v435 = vsub.f32 %v29, %v434
    %v436 = vand.u32 %v435, 4294901760
    %437 = vmatmul.mubr.f32.gmra.mxu0 %v436
    %v438 = vpop.f32.mrf.mxu0
    %v439 = vadd.f32 %v337, %v438
    %v440 = vpop.f32.mrf.mxu0
    %v441 = vadd.f32 %v339, %v440
    %442 = vmatprep.mubr.f32.mxu0 0.0
    %v443 = vand.u32 %v32, 4294901760
    %v444 = vsub.f32 %v32, %v443
    %v445 = vand.u32 %v444, 4294901760
    %446 = vmatmul.mubr.f32.gmra.mxu0 %v445
    %v447 = vpop.f32.mrf.mxu0
    %v448 = vadd.f32 %v345, %v447
    %v449 = vpop.f32.mrf.mxu0
    %v450 = vadd.f32 %v347, %v449
    %451 = vdwg.mxu0
    %452 = vmatprep.subr.mxu0 0.0
    %453 = vmatpush1.msra.mxu0 0.0
    %454 = vmatprep.subr.mxu0 0.0
    %455 = vmatpush1.msra.mxu0 0.0
    %456 = vmatprep.subr.mxu0 0.0
    %457 = vmatpush1.msra.mxu0 0.0
    %458 = vmatprep.subr.mxu0 0.0
    %459 = vmatpush1.msra.mxu0 0.0
    %460 = vmatprep.subr.mxu0 0.0
    %461 = vmatpush1.msra.mxu0 0.0
    %462 = vmatprep.subr.mxu0 0.0
    %463 = vmatpush1.msra.mxu0 0.0
    %464 = vmatprep.subr.mxu0 0.0
    %465 = vmatpush1.msra.mxu0 0.0
    %466 = vmatprep.subr.mxu0 0.0
    %467 = vmatpush1.msra.mxu0 0.0
    %468 = vmatprep.subr.mxu0 0.0
    %469 = vmatpush1.msra.mxu0 0.0
    %470 = vmatprep.subr.mxu0 0.0
    %471 = vmatpush1.msra.mxu0 0.0
    %472 = vmatprep.subr.mxu0 0.0
    %473 = vmatpush1.msra.mxu0 0.0
    %474 = vmatprep.subr.mxu0 0.0
    %475 = vmatpush1.msra.mxu0 0.0
    %476 = vmatprep.subr.mxu0 0.0
    %477 = vmatpush1.msra.mxu0 0.0
    %478 = vmatprep.subr.mxu0 0.0
    %479 = vmatpush1.msra.mxu0 0.0
    %480 = vmatprep.subr.mxu0 0.0
    %481 = vmatpush1.msra.mxu0 0.0
    %v482 = vand.u32 %v16, 4294901760
    %v483 = vsub.f32 %v16, %v482
    %v484 = vand.u32 %v483, 4294901760
    %485 = vmatprep.subr.mxu0 %v484
    %v486 = vand.u32 %v15, 4294901760
    %v487 = vsub.f32 %v15, %v486
    %v488 = vand.u32 %v487, 4294901760
    %489 = vmatpush1.msra.mxu0 %v488
    %490 = vmatprep.subr.mxu0 0.0
    %491 = vmatpush2.msra.mxu0 0.0
    %492 = vmatprep.subr.mxu0 0.0
    %493 = vmatpush2.msra.mxu0 0.0
    %494 = vmatprep.subr.mxu0 0.0
    %495 = vmatpush2.msra.mxu0 0.0
    %496 = vmatprep.subr.mxu0 0.0
    %497 = vmatpush2.msra.mxu0 0.0
    %498 = vmatprep.subr.mxu0 0.0
    %499 = vmatpush2.msra.mxu0 0.0
    %500 = vmatprep.subr.mxu0 0.0
    %501 = vmatpush2.msra.mxu0 0.0
    %502 = vmatprep.subr.mxu0 0.0
    %503 = vmatpush2.msra.mxu0 0.0
    %504 = vmatprep.subr.mxu0 0.0
    %505 = vmatpush2.msra.mxu0 0.0
    %506 = vmatprep.subr.mxu0 0.0
    %507 = vmatpush2.msra.mxu0 0.0
    %508 = vmatprep.subr.mxu0 0.0
    %509 = vmatpush2.msra.mxu0 0.0
    %510 = vmatprep.subr.mxu0 0.0
    %511 = vmatpush2.msra.mxu0 0.0
    %512 = vmatprep.subr.mxu0 0.0
    %513 = vmatpush2.msra.mxu0 0.0
    %514 = vmatprep.subr.mxu0 0.0
    %515 = vmatpush2.msra.mxu0 0.0
    %516 = vmatprep.subr.mxu0 0.0
    %517 = vmatpush2.msra.mxu0 0.0
    %518 = vmatprep.subr.mxu0 0.0
    %519 = vmatpush2.msra.mxu0 0.0
    %520 = vmatprep.subr.mxu0 0.0
    %521 = vmatpush2.msra.mxu0 0.0
    %522 = vmatprep.mubr.f32.mxu0 0.0
    %v523 = vand.u32 %v23, 4294901760
    %524 = vmatmul.mubr.f32.gmra.mxu0 %v523
    %v525 = vpop.f32.mrf.mxu0
    %v526 = vadd.f32 %v421, %v525
    %v527 = vpop.f32.mrf.mxu0
    %v528 = vadd.f32 %v423, %v527
    %529 = vmatprep.mubr.f32.mxu0 0.0
    %v530 = vand.u32 %v26, 4294901760
    %531 = vmatmul.mubr.f32.gmra.mxu0 %v530
    %v532 = vpop.f32.mrf.mxu0
    %v533 = vadd.f32 %v430, %v532
    %v534 = vpop.f32.mrf.mxu0
    %v535 = vadd.f32 %v432, %v534
    %536 = vmatprep.mubr.f32.mxu0 0.0
    %v537 = vand.u32 %v29, 4294901760
    %538 = vmatmul.mubr.f32.gmra.mxu0 %v537
    %v539 = vpop.f32.mrf.mxu0
    %v540 = vadd.f32 %v439, %v539
    %v541 = vpop.f32.mrf.mxu0
    %v542 = vadd.f32 %v441, %v541
    %543 = vmatprep.mubr.f32.mxu0 0.0
    %v544 = vand.u32 %v32, 4294901760
    %545 = vmatmul.mubr.f32.gmra.mxu0 %v544
    %v546 = vpop.f32.mrf.mxu0
    %v547 = vadd.f32 %v448, %v546
    %v548 = vpop.f32.mrf.mxu0
    %v549 = vadd.f32 %v450, %v548
    %550 = vdwg.mxu0
    %551 = vmatprep.subr.mxu0 0.0
    %552 = vmatpush1.msra.mxu0 0.0
    %553 = vmatprep.subr.mxu0 0.0
    %554 = vmatpush1.msra.mxu0 0.0
    %555 = vmatprep.subr.mxu0 0.0
    %556 = vmatpush1.msra.mxu0 0.0
    %557 = vmatprep.subr.mxu0 0.0
    %558 = vmatpush1.msra.mxu0 0.0
    %559 = vmatprep.subr.mxu0 0.0
    %560 = vmatpush1.msra.mxu0 0.0
    %561 = vmatprep.subr.mxu0 0.0
    %562 = vmatpush1.msra.mxu0 0.0
    %563 = vmatprep.subr.mxu0 0.0
    %564 = vmatpush1.msra.mxu0 0.0
    %565 = vmatprep.subr.mxu0 0.0
    %566 = vmatpush1.msra.mxu0 0.0
    %567 = vmatprep.subr.mxu0 0.0
    %568 = vmatpush1.msra.mxu0 0.0
    %569 = vmatprep.subr.mxu0 0.0
    %570 = vmatpush1.msra.mxu0 0.0
    %571 = vmatprep.subr.mxu0 0.0
    %572 = vmatpush1.msra.mxu0 0.0
    %573 = vmatprep.subr.mxu0 0.0
    %574 = vmatpush1.msra.mxu0 0.0
    %575 = vmatprep.subr.mxu0 0.0
    %576 = vmatpush1.msra.mxu0 0.0
    %577 = vmatprep.subr.mxu0 0.0
    %578 = vmatpush1.msra.mxu0 0.0
    %579 = vmatprep.subr.mxu0 0.0
    %580 = vmatpush1.msra.mxu0 0.0
    %v581 = vand.u32 %v16, 4294901760
    %582 = vmatprep.subr.mxu0 %v581
    %v583 = vand.u32 %v15, 4294901760
    %584 = vmatpush1.msra.mxu0 %v583
    %585 = vmatprep.subr.mxu0 0.0
    %586 = vmatpush2.msra.mxu0 0.0
    %587 = vmatprep.subr.mxu0 0.0
    %588 = vmatpush2.msra.mxu0 0.0
    %589 = vmatprep.subr.mxu0 0.0
    %590 = vmatpush2.msra.mxu0 0.0
    %591 = vmatprep.subr.mxu0 0.0
    %592 = vmatpush2.msra.mxu0 0.0
    %593 = vmatprep.subr.mxu0 0.0
    %594 = vmatpush2.msra.mxu0 0.0
    %595 = vmatprep.subr.mxu0 0.0
    %596 = vmatpush2.msra.mxu0 0.0
    %597 = vmatprep.subr.mxu0 0.0
    %598 = vmatpush2.msra.mxu0 0.0
    %599 = vmatprep.subr.mxu0 0.0
    %600 = vmatpush2.msra.mxu0 0.0
    %601 = vmatprep.subr.mxu0 0.0
    %602 = vmatpush2.msra.mxu0 0.0
    %603 = vmatprep.subr.mxu0 0.0
    %604 = vmatpush2.msra.mxu0 0.0
    %605 = vmatprep.subr.mxu0 0.0
    %606 = vmatpush2.msra.mxu0 0.0
    %607 = vmatprep.subr.mxu0 0.0
    %608 = vmatpush2.msra.mxu0 0.0
    %609 = vmatprep.subr.mxu0 0.0
    %610 = vmatpush2.msra.mxu0 0.0
    %611 = vmatprep.subr.mxu0 0.0
    %612 = vmatpush2.msra.mxu0 0.0
    %613 = vmatprep.subr.mxu0 0.0
    %614 = vmatpush2.msra.mxu0 0.0
    %615 = vmatprep.subr.mxu0 0.0
    %616 = vmatpush2.msra.mxu0 0.0
    %617 = vmatprep.mubr.f32.mxu0 0.0
    %v618 = vand.u32 %v23, 4294901760
    %619 = vmatmul.mubr.f32.gmra.mxu0 %v618
    %v620 = vpop.f32.mrf.mxu0
    %v621 = vadd.f32 %v526, %v620
    %v622 = vpop.f32.mrf.mxu0
    %v623 = vadd.f32 %v528, %v622
    %624 = vmatprep.mubr.f32.mxu0 0.0
    %v625 = vand.u32 %v26, 4294901760
    %626 = vmatmul.mubr.f32.gmra.mxu0 %v625
    %v627 = vpop.f32.mrf.mxu0
    %v628 = vadd.f32 %v533, %v627
    %v629 = vpop.f32.mrf.mxu0
    %v630 = vadd.f32 %v535, %v629
    %631 = vmatprep.mubr.f32.mxu0 0.0
    %v632 = vand.u32 %v29, 4294901760
    %633 = vmatmul.mubr.f32.gmra.mxu0 %v632
    %v634 = vpop.f32.mrf.mxu0
    %v635 = vadd.f32 %v540, %v634
    %v636 = vpop.f32.mrf.mxu0
    %v637 = vadd.f32 %v542, %v636
    %638 = vmatprep.mubr.f32.mxu0 0.0
    %v639 = vand.u32 %v32, 4294901760
    %640 = vmatmul.mubr.f32.gmra.mxu0 %v639
    %v641 = vpop.f32.mrf.mxu0
    %v642 = vadd.f32 %v547, %v641
    %v643 = vpop.f32.mrf.mxu0
    %v644 = vadd.f32 %v549, %v643
    %645 = vdwg.mxu0
    %v646 = vand.u32 2147483647, %v621
    %vm647 = vcmp.le.f32.partialorder %v646, 0.7853982
    %vm648 = vcmp.lt.s32.totalorder %v621, 0
    %v649 = vand.u32 %v621, 2139095040
    %v650 = vshrl.u32 %v649, 23
    %v651 = vsub.s32 %v650, 127
    %v652 = vand.u32 2147483647, %v621
    %v653 = vand.u32 %v652, 8388607
    %v654 = vor.u32 %v653, 8388608
    %v655 = vsub.s32 0, %v654
    %v656 = vadd.s32 %v651, 1
    %vm657 = vcmp.gt.s32.totalorder %v656, 0
    %v658 = vsel %vm657, %v656, 0
    %v659 = vshrl.u32 %v658, 5
    %v660 = vand.u32 %v658, 31
    %v661 = vsub.s32 32, %v660
    %v662 = vshrl.u32 683565275, %v661
    %v663 = vshll.u32 683565275, %v660
    %v664 = vshrl.u32 2475754826, %v661
    %v665 = vor.u32 %v663, %v664
    %v666 = vshll.u32 2475754826, %v660
    %v667 = vshrl.u32 2131351028, %v661
    %v668 = vor.u32 %v666, %v667
    %v669 = vshll.u32 2131351028, %v660
    %v670 = vshrl.u32 2102212464, %v661
    %v671 = vor.u32 %v669, %v670
    %v672 = vshll.u32 2102212464, %v660
    %v673 = vshrl.u32 920167782, %v661
    %v674 = vor.u32 %v672, %v673
    %v675 = vshll.u32 920167782, %v660
    %v676 = vshrl.u32 1326507024, %v661
    %v677 = vor.u32 %v675, %v676
    %vm678 = vcmp.lt.s32.totalorder %v659, 1
    %vm679 = vcmp.lt.s32.totalorder %v659, 2
    %vm680 = vcmp.lt.s32.totalorder %v659, 3
    %vm681 = vcmp.lt.s32.totalorder %v659, 4
    %v682 = vsel %vm678, %v662, %v665
    %v683 = vsel %vm681, %v671, 2102212464
    %v684 = vsel %vm680, %v668, %v683
    %v685 = vsel %vm679, %v682, %v684
    %v686 = vsel %vm678, %v665, %v668
    %v687 = vsel %vm681, %v674, 920167782
    %v688 = vsel %vm680, %v671, %v687
    %v689 = vsel %vm679, %v686, %v688
    %v690 = vsel %vm678, %v668, %v671
    %v691 = vsel %vm681, %v677, 1326507024
    %v692 = vsel %vm680, %v674, %v691
    %v693 = vsel %vm679, %v690, %v692
    %v694 = vshll.u32 %v654, 8
    %v695 = vmul.u32.u64.compose %v694, %v693
    %v696 = vextract.low.u32 %v695
    %v697 = vextract.high.u32 %v695
    %v698 = vmul.u32.u64.compose %v694, %v689
    %v699 = vextract.low.u32 %v698
    %v700 = vextract.high.u32 %v698
    %v701 = vmul.u32 %v694, %v685
    %v702 = vadd.s32 %v697, %v699
    %vm703 = vc.u32 %v697, %v699
    %v704 = vadd.s32 %v700, 1
    %v705 = vsel %vm703, %v704, %v700
    %v706 = vadd.s32 %v701, %v705
    %v707 = vadd.s32 %v706, 536870912
    %v708 = vshrl.u32 %v707, 30
    %v709 = vshll.u32 %v708, 30
    %v710 = vsub.s32 %v706, %v709
    %vm711 = vcmp.lt.s32.totalorder %v710, 0
    %v712 = vsub.s32 0, %v710
    %v713 = vsel %vm711, %v712, %v710
    %v714 = vclz %v713
    %v715 = vsub.s32 %v714, 2
    %vm716 = vcmp.gt.s32.totalorder 0, %v715
    %v717 = vsel %vm716, 0, %v715
    %v718 = vsub.s32 32, %v717
    %v719 = vshll.u32 %v710, %v717
    %v720 = vshrl.u32 %v702, %v718
    %v721 = vor.u32 %v719, %v720
    %v722 = vsub.s32 4294967266, %v717
    %v723 = vadd.s32 %v722, 127
    %v724 = vshll.u32 %v723, 23
    %v725 = vor.u32 4788187, %v724
    %v726 = vand.u32 2147483647, %v725
    %v728 = vcvt.s32.f32 %v721
    %v729 = vmul.f32 %v728, %v726
    %v730 = vxor.u32 %v729, 2147483648
    %v731 = vsel %vm648, %v730, %v729
    %v732 = vsub.s32 4, %v708
    %v733 = vsel %vm648, %v732, %v708
    %v734 = vsel %vm647, %v621, %v731
    %v735 = vsel %vm647, 0, %v733
    %v736 = vcosq.f32.pop %v734
    %v737 = vsinq.f32.pop %v734
    %vm738 = vweird.f32 %v621
    %v739 = vadd.s32 %v735, 3
    %v740 = vand.u32 %v739, 3
    %vm741 = vcmp.lt.s32.totalorder %v740, 2
    %vm742 = vcmp.eq.s32.totalorder %v740, 0
    %v743 = vxor.u32 %v737, 2147483648
    %v744 = vsel %vm742, %v736, %v743
    %vm745 = vcmp.eq.s32.totalorder %v740, 2
    %v746 = vxor.u32 %v736, 2147483648
    %v747 = vsel %vm745, %v746, %v737
    %v748 = vsel %vm741, %v744, %v747
    %v749 = vsel %vm738, nan, %v748
    %v750 = vand.u32 2147483647, %v623
    %vm751 = vcmp.le.f32.partialorder %v750, 0.7853982
    %vm752 = vcmp.lt.s32.totalorder %v623, 0
    %v753 = vand.u32 %v623, 2139095040
    %v754 = vshrl.u32 %v753, 23
    %v755 = vsub.s32 %v754, 127
    %v756 = vand.u32 2147483647, %v623
    %v757 = vand.u32 %v756, 8388607
    %v758 = vor.u32 %v757, 8388608
    %v759 = vsub.s32 0, %v758
    %v760 = vadd.s32 %v755, 1
    %vm761 = vcmp.gt.s32.totalorder %v760, 0
    %v762 = vsel %vm761, %v760, 0
    %v763 = vshrl.u32 %v762, 5
    %v764 = vand.u32 %v762, 31
    %v765 = vsub.s32 32, %v764
    %v766 = vshrl.u32 683565275, %v765
    %v767 = vshll.u32 683565275, %v764
    %v768 = vshrl.u32 2475754826, %v765
    %v769 = vor.u32 %v767, %v768
    %v770 = vshll.u32 2475754826, %v764
    %v771 = vshrl.u32 2131351028, %v765
    %v772 = vor.u32 %v770, %v771
    %v773 = vshll.u32 2131351028, %v764
    %v774 = vshrl.u32 2102212464, %v765
    %v775 = vor.u32 %v773, %v774
    %v776 = vshll.u32 2102212464, %v764
    %v777 = vshrl.u32 920167782, %v765
    %v778 = vor.u32 %v776, %v777
    %v779 = vshll.u32 920167782, %v764
    %v780 = vshrl.u32 1326507024, %v765
    %v781 = vor.u32 %v779, %v780
    %vm782 = vcmp.lt.s32.totalorder %v763, 1
    %vm783 = vcmp.lt.s32.totalorder %v763, 2
    %vm784 = vcmp.lt.s32.totalorder %v763, 3
    %vm785 = vcmp.lt.s32.totalorder %v763, 4
    %v786 = vsel %vm782, %v766, %v769
    %v787 = vsel %vm785, %v775, 2102212464
    %v788 = vsel %vm784, %v772, %v787
    %v789 = vsel %vm783, %v786, %v788
    %v790 = vsel %vm782, %v769, %v772
    %v791 = vsel %vm785, %v778, 920167782
    %v792 = vsel %vm784, %v775, %v791
    %v793 = vsel %vm783, %v790, %v792
    %v794 = vsel %vm782, %v772, %v775
    %v795 = vsel %vm785, %v781, 1326507024
    %v796 = vsel %vm784, %v778, %v795
    %v797 = vsel %vm783, %v794, %v796
    %v798 = vshll.u32 %v758, 8
    %v799 = vmul.u32.u64.compose %v798, %v797
    %v800 = vextract.low.u32 %v799
    %v801 = vextract.high.u32 %v799
    %v802 = vmul.u32.u64.compose %v798, %v793
    %v803 = vextract.low.u32 %v802
    %v804 = vextract.high.u32 %v802
    %v805 = vmul.u32 %v798, %v789
    %v806 = vadd.s32 %v801, %v803
    %vm807 = vc.u32 %v801, %v803
    %v808 = vadd.s32 %v804, 1
    %v809 = vsel %vm807, %v808, %v804
    %v810 = vadd.s32 %v805, %v809
    %v811 = vadd.s32 %v810, 536870912
    %v812 = vshrl.u32 %v811, 30
    %v813 = vshll.u32 %v812, 30
    %v814 = vsub.s32 %v810, %v813
    %vm815 = vcmp.lt.s32.totalorder %v814, 0
    %v816 = vsub.s32 0, %v814
    %v817 = vsel %vm815, %v816, %v814
    %v818 = vclz %v817
    %v819 = vsub.s32 %v818, 2
    %vm820 = vcmp.gt.s32.totalorder 0, %v819
    %v821 = vsel %vm820, 0, %v819
    %v822 = vsub.s32 32, %v821
    %v823 = vshll.u32 %v814, %v821
    %v824 = vshrl.u32 %v806, %v822
    %v825 = vor.u32 %v823, %v824
    %v826 = vsub.s32 4294967266, %v821
    %v827 = vadd.s32 %v826, 127
    %v828 = vshll.u32 %v827, 23
    %v829 = vor.u32 4788187, %v828
    %v830 = vand.u32 2147483647, %v829
    %v832 = vcvt.s32.f32 %v825
    %v833 = vmul.f32 %v832, %v830
    %v834 = vxor.u32 %v833, 2147483648
    %v835 = vsel %vm752, %v834, %v833
    %v836 = vsub.s32 4, %v812
    %v837 = vsel %vm752, %v836, %v812
    %v838 = vsel %vm751, %v623, %v835
    %v839 = vsel %vm751, 0, %v837
    %v840 = vcosq.f32.pop %v838
    %v841 = vsinq.f32.pop %v838
    %vm842 = vweird.f32 %v623
    %v843 = vadd.s32 %v839, 3
    %v844 = vand.u32 %v843, 3
    %vm845 = vcmp.lt.s32.totalorder %v844, 2
    %vm846 = vcmp.eq.s32.totalorder %v844, 0
    %v847 = vxor.u32 %v841, 2147483648
    %v848 = vsel %vm846, %v840, %v847
    %vm849 = vcmp.eq.s32.totalorder %v844, 2
    %v850 = vxor.u32 %v840, 2147483648
    %v851 = vsel %vm849, %v850, %v841
    %v852 = vsel %vm845, %v848, %v851
    %v853 = vsel %vm842, nan, %v852
    %v854 = vand.u32 2147483647, %v628
    %vm855 = vcmp.le.f32.partialorder %v854, 0.7853982
    %vm856 = vcmp.lt.s32.totalorder %v628, 0
    %v857 = vand.u32 %v628, 2139095040
    %v858 = vshrl.u32 %v857, 23
    %v859 = vsub.s32 %v858, 127
    %v860 = vand.u32 2147483647, %v628
    %v861 = vand.u32 %v860, 8388607
    %v862 = vor.u32 %v861, 8388608
    %v863 = vsub.s32 0, %v862
    %v864 = vadd.s32 %v859, 1
    %vm865 = vcmp.gt.s32.totalorder %v864, 0
    %v866 = vsel %vm865, %v864, 0
    %v867 = vshrl.u32 %v866, 5
    %v868 = vand.u32 %v866, 31
    %v869 = vsub.s32 32, %v868
    %v870 = vshrl.u32 683565275, %v869
    %v871 = vshll.u32 683565275, %v868
    %v872 = vshrl.u32 2475754826, %v869
    %v873 = vor.u32 %v871, %v872
    %v874 = vshll.u32 2475754826, %v868
    %v875 = vshrl.u32 2131351028, %v869
    %v876 = vor.u32 %v874, %v875
    %v877 = vshll.u32 2131351028, %v868
    %v878 = vshrl.u32 2102212464, %v869
    %v879 = vor.u32 %v877, %v878
    %v880 = vshll.u32 2102212464, %v868
    %v881 = vshrl.u32 920167782, %v869
    %v882 = vor.u32 %v880, %v881
    %v883 = vshll.u32 920167782, %v868
    %v884 = vshrl.u32 1326507024, %v869
    %v885 = vor.u32 %v883, %v884
    %vm886 = vcmp.lt.s32.totalorder %v867, 1
    %vm887 = vcmp.lt.s32.totalorder %v867, 2
    %vm888 = vcmp.lt.s32.totalorder %v867, 3
    %vm889 = vcmp.lt.s32.totalorder %v867, 4
    %v890 = vsel %vm886, %v870, %v873
    %v891 = vsel %vm889, %v879, 2102212464
    %v892 = vsel %vm888, %v876, %v891
    %v893 = vsel %vm887, %v890, %v892
    %v894 = vsel %vm886, %v873, %v876
    %v895 = vsel %vm889, %v882, 920167782
    %v896 = vsel %vm888, %v879, %v895
    %v897 = vsel %vm887, %v894, %v896
    %v898 = vsel %vm886, %v876, %v879
    %v899 = vsel %vm889, %v885, 1326507024
    %v900 = vsel %vm888, %v882, %v899
    %v901 = vsel %vm887, %v898, %v900
    %v902 = vshll.u32 %v862, 8
    %v903 = vmul.u32.u64.compose %v902, %v901
    %v904 = vextract.low.u32 %v903
    %v905 = vextract.high.u32 %v903
    %v906 = vmul.u32.u64.compose %v902, %v897
    %v907 = vextract.low.u32 %v906
    %v908 = vextract.high.u32 %v906
    %v909 = vmul.u32 %v902, %v893
    %v910 = vadd.s32 %v905, %v907
    %vm911 = vc.u32 %v905, %v907
    %v912 = vadd.s32 %v908, 1
    %v913 = vsel %vm911, %v912, %v908
    %v914 = vadd.s32 %v909, %v913
    %v915 = vadd.s32 %v914, 536870912
    %v916 = vshrl.u32 %v915, 30
    %v917 = vshll.u32 %v916, 30
    %v918 = vsub.s32 %v914, %v917
    %vm919 = vcmp.lt.s32.totalorder %v918, 0
    %v920 = vsub.s32 0, %v918
    %v921 = vsel %vm919, %v920, %v918
    %v922 = vclz %v921
    %v923 = vsub.s32 %v922, 2
    %vm924 = vcmp.gt.s32.totalorder 0, %v923
    %v925 = vsel %vm924, 0, %v923
    %v926 = vsub.s32 32, %v925
    %v927 = vshll.u32 %v918, %v925
    %v928 = vshrl.u32 %v910, %v926
    %v929 = vor.u32 %v927, %v928
    %v930 = vsub.s32 4294967266, %v925
    %v931 = vadd.s32 %v930, 127
    %v932 = vshll.u32 %v931, 23
    %v933 = vor.u32 4788187, %v932
    %v934 = vand.u32 2147483647, %v933
    %v936 = vcvt.s32.f32 %v929
    %v937 = vmul.f32 %v936, %v934
    %v938 = vxor.u32 %v937, 2147483648
    %v939 = vsel %vm856, %v938, %v937
    %v940 = vsub.s32 4, %v916
    %v941 = vsel %vm856, %v940, %v916
    %v942 = vsel %vm855, %v628, %v939
    %v943 = vsel %vm855, 0, %v941
    %v944 = vcosq.f32.pop %v942
    %v945 = vsinq.f32.pop %v942
    %vm946 = vweird.f32 %v628
    %v947 = vadd.s32 %v943, 3
    %v948 = vand.u32 %v947, 3
    %vm949 = vcmp.lt.s32.totalorder %v948, 2
    %vm950 = vcmp.eq.s32.totalorder %v948, 0
    %v951 = vxor.u32 %v945, 2147483648
    %v952 = vsel %vm950, %v944, %v951
    %vm953 = vcmp.eq.s32.totalorder %v948, 2
    %v954 = vxor.u32 %v944, 2147483648
    %v955 = vsel %vm953, %v954, %v945
    %v956 = vsel %vm949, %v952, %v955
    %v957 = vsel %vm946, nan, %v956
    %v958 = vand.u32 2147483647, %v630
    %vm959 = vcmp.le.f32.partialorder %v958, 0.7853982
    %vm960 = vcmp.lt.s32.totalorder %v630, 0
    %v961 = vand.u32 %v630, 2139095040
    %v962 = vshrl.u32 %v961, 23
    %v963 = vsub.s32 %v962, 127
    %v964 = vand.u32 2147483647, %v630
    %v965 = vand.u32 %v964, 8388607
    %v966 = vor.u32 %v965, 8388608
    %v967 = vsub.s32 0, %v966
    %v968 = vadd.s32 %v963, 1
    %vm969 = vcmp.gt.s32.totalorder %v968, 0
    %v970 = vsel %vm969, %v968, 0
    %v971 = vshrl.u32 %v970, 5
    %v972 = vand.u32 %v970, 31
    %v973 = vsub.s32 32, %v972
    %v974 = vshrl.u32 683565275, %v973
    %v975 = vshll.u32 683565275, %v972
    %v976 = vshrl.u32 2475754826, %v973
    %v977 = vor.u32 %v975, %v976
    %v978 = vshll.u32 2475754826, %v972
    %v979 = vshrl.u32 2131351028, %v973
    %v980 = vor.u32 %v978, %v979
    %v981 = vshll.u32 2131351028, %v972
    %v982 = vshrl.u32 2102212464, %v973
    %v983 = vor.u32 %v981, %v982
    %v984 = vshll.u32 2102212464, %v972
    %v985 = vshrl.u32 920167782, %v973
    %v986 = vor.u32 %v984, %v985
    %v987 = vshll.u32 920167782, %v972
    %v988 = vshrl.u32 1326507024, %v973
    %v989 = vor.u32 %v987, %v988
    %vm990 = vcmp.lt.s32.totalorder %v971, 1
    %vm991 = vcmp.lt.s32.totalorder %v971, 2
    %vm992 = vcmp.lt.s32.totalorder %v971, 3
    %vm993 = vcmp.lt.s32.totalorder %v971, 4
    %v994 = vsel %vm990, %v974, %v977
    %v995 = vsel %vm993, %v983, 2102212464
    %v996 = vsel %vm992, %v980, %v995
    %v997 = vsel %vm991, %v994, %v996
    %v998 = vsel %vm990, %v977, %v980
    %v999 = vsel %vm993, %v986, 920167782
    %v1000 = vsel %vm992, %v983, %v999
    %v1001 = vsel %vm991, %v998, %v1000
    %v1002 = vsel %vm990, %v980, %v983
    %v1003 = vsel %vm993, %v989, 1326507024
    %v1004 = vsel %vm992, %v986, %v1003
    %v1005 = vsel %vm991, %v1002, %v1004
    %v1006 = vshll.u32 %v966, 8
    %v1007 = vmul.u32.u64.compose %v1006, %v1005
    %v1008 = vextract.low.u32 %v1007
    %v1009 = vextract.high.u32 %v1007
    %v1010 = vmul.u32.u64.compose %v1006, %v1001
    %v1011 = vextract.low.u32 %v1010
    %v1012 = vextract.high.u32 %v1010
    %v1013 = vmul.u32 %v1006, %v997
    %v1014 = vadd.s32 %v1009, %v1011
    %vm1015 = vc.u32 %v1009, %v1011
    %v1016 = vadd.s32 %v1012, 1
    %v1017 = vsel %vm1015, %v1016, %v1012
    %v1018 = vadd.s32 %v1013, %v1017
    %v1019 = vadd.s32 %v1018, 536870912
    %v1020 = vshrl.u32 %v1019, 30
    %v1021 = vshll.u32 %v1020, 30
    %v1022 = vsub.s32 %v1018, %v1021
    %vm1023 = vcmp.lt.s32.totalorder %v1022, 0
    %v1024 = vsub.s32 0, %v1022
    %v1025 = vsel %vm1023, %v1024, %v1022
    %v1026 = vclz %v1025
    %v1027 = vsub.s32 %v1026, 2
    %vm1028 = vcmp.gt.s32.totalorder 0, %v1027
    %v1029 = vsel %vm1028, 0, %v1027
    %v1030 = vsub.s32 32, %v1029
    %v1031 = vshll.u32 %v1022, %v1029
    %v1032 = vshrl.u32 %v1014, %v1030
    %v1033 = vor.u32 %v1031, %v1032
    %v1034 = vsub.s32 4294967266, %v1029
    %v1035 = vadd.s32 %v1034, 127
    %v1036 = vshll.u32 %v1035, 23
    %v1037 = vor.u32 4788187, %v1036
    %v1038 = vand.u32 2147483647, %v1037
    %v1040 = vcvt.s32.f32 %v1033
    %v1041 = vmul.f32 %v1040, %v1038
    %v1042 = vxor.u32 %v1041, 2147483648
    %v1043 = vsel %vm960, %v1042, %v1041
    %v1044 = vsub.s32 4, %v1020
    %v1045 = vsel %vm960, %v1044, %v1020
    %v1046 = vsel %vm959, %v630, %v1043
    %v1047 = vsel %vm959, 0, %v1045
    %v1048 = vcosq.f32.pop %v1046
    %v1049 = vsinq.f32.pop %v1046
    %vm1050 = vweird.f32 %v630
    %v1051 = vadd.s32 %v1047, 3
    %v1052 = vand.u32 %v1051, 3
    %vm1053 = vcmp.lt.s32.totalorder %v1052, 2
    %vm1054 = vcmp.eq.s32.totalorder %v1052, 0
    %v1055 = vxor.u32 %v1049, 2147483648
    %v1056 = vsel %vm1054, %v1048, %v1055
    %vm1057 = vcmp.eq.s32.totalorder %v1052, 2
    %v1058 = vxor.u32 %v1048, 2147483648
    %v1059 = vsel %vm1057, %v1058, %v1049
    %v1060 = vsel %vm1053, %v1056, %v1059
    %v1061 = vsel %vm1050, nan, %v1060
    %v1062 = vand.u32 2147483647, %v635
    %vm1063 = vcmp.le.f32.partialorder %v1062, 0.7853982
    %vm1064 = vcmp.lt.s32.totalorder %v635, 0
    %v1065 = vand.u32 %v635, 2139095040
    %v1066 = vshrl.u32 %v1065, 23
    %v1067 = vsub.s32 %v1066, 127
    %v1068 = vand.u32 2147483647, %v635
    %v1069 = vand.u32 %v1068, 8388607
    %v1070 = vor.u32 %v1069, 8388608
    %v1071 = vsub.s32 0, %v1070
    %v1072 = vadd.s32 %v1067, 1
    %vm1073 = vcmp.gt.s32.totalorder %v1072, 0
    %v1074 = vsel %vm1073, %v1072, 0
    %v1075 = vshrl.u32 %v1074, 5
    %v1076 = vand.u32 %v1074, 31
    %v1077 = vsub.s32 32, %v1076
    %v1078 = vshrl.u32 683565275, %v1077
    %v1079 = vshll.u32 683565275, %v1076
    %v1080 = vshrl.u32 2475754826, %v1077
    %v1081 = vor.u32 %v1079, %v1080
    %v1082 = vshll.u32 2475754826, %v1076
    %v1083 = vshrl.u32 2131351028, %v1077
    %v1084 = vor.u32 %v1082, %v1083
    %v1085 = vshll.u32 2131351028, %v1076
    %v1086 = vshrl.u32 2102212464, %v1077
    %v1087 = vor.u32 %v1085, %v1086
    %v1088 = vshll.u32 2102212464, %v1076
    %v1089 = vshrl.u32 920167782, %v1077
    %v1090 = vor.u32 %v1088, %v1089
    %v1091 = vshll.u32 920167782, %v1076
    %v1092 = vshrl.u32 1326507024, %v1077
    %v1093 = vor.u32 %v1091, %v1092
    %vm1094 = vcmp.lt.s32.totalorder %v1075, 1
    %vm1095 = vcmp.lt.s32.totalorder %v1075, 2
    %vm1096 = vcmp.lt.s32.totalorder %v1075, 3
    %vm1097 = vcmp.lt.s32.totalorder %v1075, 4
    %v1098 = vsel %vm1094, %v1078, %v1081
    %v1099 = vsel %vm1097, %v1087, 2102212464
    %v1100 = vsel %vm1096, %v1084, %v1099
    %v1101 = vsel %vm1095, %v1098, %v1100
    %v1102 = vsel %vm1094, %v1081, %v1084
    %v1103 = vsel %vm1097, %v1090, 920167782
    %v1104 = vsel %vm1096, %v1087, %v1103
    %v1105 = vsel %vm1095, %v1102, %v1104
    %v1106 = vsel %vm1094, %v1084, %v1087
    %v1107 = vsel %vm1097, %v1093, 1326507024
    %v1108 = vsel %vm1096, %v1090, %v1107
    %v1109 = vsel %vm1095, %v1106, %v1108
    %v1110 = vshll.u32 %v1070, 8
    %v1111 = vmul.u32.u64.compose %v1110, %v1109
    %v1112 = vextract.low.u32 %v1111
    %v1113 = vextract.high.u32 %v1111
    %v1114 = vmul.u32.u64.compose %v1110, %v1105
    %v1115 = vextract.low.u32 %v1114
    %v1116 = vextract.high.u32 %v1114
    %v1117 = vmul.u32 %v1110, %v1101
    %v1118 = vadd.s32 %v1113, %v1115
    %vm1119 = vc.u32 %v1113, %v1115
    %v1120 = vadd.s32 %v1116, 1
    %v1121 = vsel %vm1119, %v1120, %v1116
    %v1122 = vadd.s32 %v1117, %v1121
    %v1123 = vadd.s32 %v1122, 536870912
    %v1124 = vshrl.u32 %v1123, 30
    %v1125 = vshll.u32 %v1124, 30
    %v1126 = vsub.s32 %v1122, %v1125
    %vm1127 = vcmp.lt.s32.totalorder %v1126, 0
    %v1128 = vsub.s32 0, %v1126
    %v1129 = vsel %vm1127, %v1128, %v1126
    %v1130 = vclz %v1129
    %v1131 = vsub.s32 %v1130, 2
    %vm1132 = vcmp.gt.s32.totalorder 0, %v1131
    %v1133 = vsel %vm1132, 0, %v1131
    %v1134 = vsub.s32 32, %v1133
    %v1135 = vshll.u32 %v1126, %v1133
    %v1136 = vshrl.u32 %v1118, %v1134
    %v1137 = vor.u32 %v1135, %v1136
    %v1138 = vsub.s32 4294967266, %v1133
    %v1139 = vadd.s32 %v1138, 127
    %v1140 = vshll.u32 %v1139, 23
    %v1141 = vor.u32 4788187, %v1140
    %v1142 = vand.u32 2147483647, %v1141
    %v1144 = vcvt.s32.f32 %v1137
    %v1145 = vmul.f32 %v1144, %v1142
    %v1146 = vxor.u32 %v1145, 2147483648
    %v1147 = vsel %vm1064, %v1146, %v1145
    %v1148 = vsub.s32 4, %v1124
    %v1149 = vsel %vm1064, %v1148, %v1124
    %v1150 = vsel %vm1063, %v635, %v1147
    %v1151 = vsel %vm1063, 0, %v1149
    %v1152 = vcosq.f32.pop %v1150
    %v1153 = vsinq.f32.pop %v1150
    %vm1154 = vweird.f32 %v635
    %v1155 = vadd.s32 %v1151, 3
    %v1156 = vand.u32 %v1155, 3
    %vm1157 = vcmp.lt.s32.totalorder %v1156, 2
    %vm1158 = vcmp.eq.s32.totalorder %v1156, 0
    %v1159 = vxor.u32 %v1153, 2147483648
    %v1160 = vsel %vm1158, %v1152, %v1159
    %vm1161 = vcmp.eq.s32.totalorder %v1156, 2
    %v1162 = vxor.u32 %v1152, 2147483648
    %v1163 = vsel %vm1161, %v1162, %v1153
    %v1164 = vsel %vm1157, %v1160, %v1163
    %v1165 = vsel %vm1154, nan, %v1164
    %v1166 = vand.u32 2147483647, %v637
    %vm1167 = vcmp.le.f32.partialorder %v1166, 0.7853982
    %vm1168 = vcmp.lt.s32.totalorder %v637, 0
    %v1169 = vand.u32 %v637, 2139095040
    %v1170 = vshrl.u32 %v1169, 23
    %v1171 = vsub.s32 %v1170, 127
    %v1172 = vand.u32 2147483647, %v637
    %v1173 = vand.u32 %v1172, 8388607
    %v1174 = vor.u32 %v1173, 8388608
    %v1175 = vsub.s32 0, %v1174
    %v1176 = vadd.s32 %v1171, 1
    %vm1177 = vcmp.gt.s32.totalorder %v1176, 0
    %v1178 = vsel %vm1177, %v1176, 0
    %v1179 = vshrl.u32 %v1178, 5
    %v1180 = vand.u32 %v1178, 31
    %v1181 = vsub.s32 32, %v1180
    %v1182 = vshrl.u32 683565275, %v1181
    %v1183 = vshll.u32 683565275, %v1180
    %v1184 = vshrl.u32 2475754826, %v1181
    %v1185 = vor.u32 %v1183, %v1184
    %v1186 = vshll.u32 2475754826, %v1180
    %v1187 = vshrl.u32 2131351028, %v1181
    %v1188 = vor.u32 %v1186, %v1187
    %v1189 = vshll.u32 2131351028, %v1180
    %v1190 = vshrl.u32 2102212464, %v1181
    %v1191 = vor.u32 %v1189, %v1190
    %v1192 = vshll.u32 2102212464, %v1180
    %v1193 = vshrl.u32 920167782, %v1181
    %v1194 = vor.u32 %v1192, %v1193
    %v1195 = vshll.u32 920167782, %v1180
    %v1196 = vshrl.u32 1326507024, %v1181
    %v1197 = vor.u32 %v1195, %v1196
    %vm1198 = vcmp.lt.s32.totalorder %v1179, 1
    %vm1199 = vcmp.lt.s32.totalorder %v1179, 2
    %vm1200 = vcmp.lt.s32.totalorder %v1179, 3
    %vm1201 = vcmp.lt.s32.totalorder %v1179, 4
    %v1202 = vsel %vm1198, %v1182, %v1185
    %v1203 = vsel %vm1201, %v1191, 2102212464
    %v1204 = vsel %vm1200, %v1188, %v1203
    %v1205 = vsel %vm1199, %v1202, %v1204
    %v1206 = vsel %vm1198, %v1185, %v1188
    %v1207 = vsel %vm1201, %v1194, 920167782
    %v1208 = vsel %vm1200, %v1191, %v1207
    %v1209 = vsel %vm1199, %v1206, %v1208
    %v1210 = vsel %vm1198, %v1188, %v1191
    %v1211 = vsel %vm1201, %v1197, 1326507024
    %v1212 = vsel %vm1200, %v1194, %v1211
    %v1213 = vsel %vm1199, %v1210, %v1212
    %v1214 = vshll.u32 %v1174, 8
    %v1215 = vmul.u32.u64.compose %v1214, %v1213
    %v1216 = vextract.low.u32 %v1215
    %v1217 = vextract.high.u32 %v1215
    %v1218 = vmul.u32.u64.compose %v1214, %v1209
    %v1219 = vextract.low.u32 %v1218
    %v1220 = vextract.high.u32 %v1218
    %v1221 = vmul.u32 %v1214, %v1205
    %v1222 = vadd.s32 %v1217, %v1219
    %vm1223 = vc.u32 %v1217, %v1219
    %v1224 = vadd.s32 %v1220, 1
    %v1225 = vsel %vm1223, %v1224, %v1220
    %v1226 = vadd.s32 %v1221, %v1225
    %v1227 = vadd.s32 %v1226, 536870912
    %v1228 = vshrl.u32 %v1227, 30
    %v1229 = vshll.u32 %v1228, 30
    %v1230 = vsub.s32 %v1226, %v1229
    %vm1231 = vcmp.lt.s32.totalorder %v1230, 0
    %v1232 = vsub.s32 0, %v1230
    %v1233 = vsel %vm1231, %v1232, %v1230
    %v1234 = vclz %v1233
    %v1235 = vsub.s32 %v1234, 2
    %vm1236 = vcmp.gt.s32.totalorder 0, %v1235
    %v1237 = vsel %vm1236, 0, %v1235
    %v1238 = vsub.s32 32, %v1237
    %v1239 = vshll.u32 %v1230, %v1237
    %v1240 = vshrl.u32 %v1222, %v1238
    %v1241 = vor.u32 %v1239, %v1240
    %v1242 = vsub.s32 4294967266, %v1237
    %v1243 = vadd.s32 %v1242, 127
    %v1244 = vshll.u32 %v1243, 23
    %v1245 = vor.u32 4788187, %v1244
    %v1246 = vand.u32 2147483647, %v1245
    %v1248 = vcvt.s32.f32 %v1241
    %v1249 = vmul.f32 %v1248, %v1246
    %v1250 = vxor.u32 %v1249, 2147483648
    %v1251 = vsel %vm1168, %v1250, %v1249
    %v1252 = vsub.s32 4, %v1228
    %v1253 = vsel %vm1168, %v1252, %v1228
    %v1254 = vsel %vm1167, %v637, %v1251
    %v1255 = vsel %vm1167, 0, %v1253
    %v1256 = vcosq.f32.pop %v1254
    %v1257 = vsinq.f32.pop %v1254
    %vm1258 = vweird.f32 %v637
    %v1259 = vadd.s32 %v1255, 3
    %v1260 = vand.u32 %v1259, 3
    %vm1261 = vcmp.lt.s32.totalorder %v1260, 2
    %vm1262 = vcmp.eq.s32.totalorder %v1260, 0
    %v1263 = vxor.u32 %v1257, 2147483648
    %v1264 = vsel %vm1262, %v1256, %v1263
    %vm1265 = vcmp.eq.s32.totalorder %v1260, 2
    %v1266 = vxor.u32 %v1256, 2147483648
    %v1267 = vsel %vm1265, %v1266, %v1257
    %v1268 = vsel %vm1261, %v1264, %v1267
    %v1269 = vsel %vm1258, nan, %v1268
    %v1270 = vand.u32 2147483647, %v642
    %vm1271 = vcmp.le.f32.partialorder %v1270, 0.7853982
    %vm1272 = vcmp.lt.s32.totalorder %v642, 0
    %v1273 = vand.u32 %v642, 2139095040
    %v1274 = vshrl.u32 %v1273, 23
    %v1275 = vsub.s32 %v1274, 127
    %v1276 = vand.u32 2147483647, %v642
    %v1277 = vand.u32 %v1276, 8388607
    %v1278 = vor.u32 %v1277, 8388608
    %v1279 = vsub.s32 0, %v1278
    %v1280 = vadd.s32 %v1275, 1
    %vm1281 = vcmp.gt.s32.totalorder %v1280, 0
    %v1282 = vsel %vm1281, %v1280, 0
    %v1283 = vshrl.u32 %v1282, 5
    %v1284 = vand.u32 %v1282, 31
    %v1285 = vsub.s32 32, %v1284
    %v1286 = vshrl.u32 683565275, %v1285
    %v1287 = vshll.u32 683565275, %v1284
    %v1288 = vshrl.u32 2475754826, %v1285
    %v1289 = vor.u32 %v1287, %v1288
    %v1290 = vshll.u32 2475754826, %v1284
    %v1291 = vshrl.u32 2131351028, %v1285
    %v1292 = vor.u32 %v1290, %v1291
    %v1293 = vshll.u32 2131351028, %v1284
    %v1294 = vshrl.u32 2102212464, %v1285
    %v1295 = vor.u32 %v1293, %v1294
    %v1296 = vshll.u32 2102212464, %v1284
    %v1297 = vshrl.u32 920167782, %v1285
    %v1298 = vor.u32 %v1296, %v1297
    %v1299 = vshll.u32 920167782, %v1284
    %v1300 = vshrl.u32 1326507024, %v1285
    %v1301 = vor.u32 %v1299, %v1300
    %vm1302 = vcmp.lt.s32.totalorder %v1283, 1
    %vm1303 = vcmp.lt.s32.totalorder %v1283, 2
    %vm1304 = vcmp.lt.s32.totalorder %v1283, 3
    %vm1305 = vcmp.lt.s32.totalorder %v1283, 4
    %v1306 = vsel %vm1302, %v1286, %v1289
    %v1307 = vsel %vm1305, %v1295, 2102212464
    %v1308 = vsel %vm1304, %v1292, %v1307
    %v1309 = vsel %vm1303, %v1306, %v1308
    %v1310 = vsel %vm1302, %v1289, %v1292
    %v1311 = vsel %vm1305, %v1298, 920167782
    %v1312 = vsel %vm1304, %v1295, %v1311
    %v1313 = vsel %vm1303, %v1310, %v1312
    %v1314 = vsel %vm1302, %v1292, %v1295
    %v1315 = vsel %vm1305, %v1301, 1326507024
    %v1316 = vsel %vm1304, %v1298, %v1315
    %v1317 = vsel %vm1303, %v1314, %v1316
    %v1318 = vshll.u32 %v1278, 8
    %v1319 = vmul.u32.u64.compose %v1318, %v1317
    %v1320 = vextract.low.u32 %v1319
    %v1321 = vextract.high.u32 %v1319
    %v1322 = vmul.u32.u64.compose %v1318, %v1313
    %v1323 = vextract.low.u32 %v1322
    %v1324 = vextract.high.u32 %v1322
    %v1325 = vmul.u32 %v1318, %v1309
    %v1326 = vadd.s32 %v1321, %v1323
    %vm1327 = vc.u32 %v1321, %v1323
    %v1328 = vadd.s32 %v1324, 1
    %v1329 = vsel %vm1327, %v1328, %v1324
    %v1330 = vadd.s32 %v1325, %v1329
    %v1331 = vadd.s32 %v1330, 536870912
    %v1332 = vshrl.u32 %v1331, 30
    %v1333 = vshll.u32 %v1332, 30
    %v1334 = vsub.s32 %v1330, %v1333
    %vm1335 = vcmp.lt.s32.totalorder %v1334, 0
    %v1336 = vsub.s32 0, %v1334
    %v1337 = vsel %vm1335, %v1336, %v1334
    %v1338 = vclz %v1337
    %v1339 = vsub.s32 %v1338, 2
    %vm1340 = vcmp.gt.s32.totalorder 0, %v1339
    %v1341 = vsel %vm1340, 0, %v1339
    %v1342 = vsub.s32 32, %v1341
    %v1343 = vshll.u32 %v1334, %v1341
    %v1344 = vshrl.u32 %v1326, %v1342
    %v1345 = vor.u32 %v1343, %v1344
    %v1346 = vsub.s32 4294967266, %v1341
    %v1347 = vadd.s32 %v1346, 127
    %v1348 = vshll.u32 %v1347, 23
    %v1349 = vor.u32 4788187, %v1348
    %v1350 = vand.u32 2147483647, %v1349
    %v1352 = vcvt.s32.f32 %v1345
    %v1353 = vmul.f32 %v1352, %v1350
    %v1354 = vxor.u32 %v1353, 2147483648
    %v1355 = vsel %vm1272, %v1354, %v1353
    %v1356 = vsub.s32 4, %v1332
    %v1357 = vsel %vm1272, %v1356, %v1332
    %v1358 = vsel %vm1271, %v642, %v1355
    %v1359 = vsel %vm1271, 0, %v1357
    %v1360 = vcosq.f32.pop %v1358
    %v1361 = vsinq.f32.pop %v1358
    %vm1362 = vweird.f32 %v642
    %v1363 = vadd.s32 %v1359, 3
    %v1364 = vand.u32 %v1363, 3
    %vm1365 = vcmp.lt.s32.totalorder %v1364, 2
    %vm1366 = vcmp.eq.s32.totalorder %v1364, 0
    %v1367 = vxor.u32 %v1361, 2147483648
    %v1368 = vsel %vm1366, %v1360, %v1367
    %vm1369 = vcmp.eq.s32.totalorder %v1364, 2
    %v1370 = vxor.u32 %v1360, 2147483648
    %v1371 = vsel %vm1369, %v1370, %v1361
    %v1372 = vsel %vm1365, %v1368, %v1371
    %v1373 = vsel %vm1362, nan, %v1372
    %v1374 = vand.u32 2147483647, %v644
    %vm1375 = vcmp.le.f32.partialorder %v1374, 0.7853982
    %vm1376 = vcmp.lt.s32.totalorder %v644, 0
    %v1377 = vand.u32 %v644, 2139095040
    %v1378 = vshrl.u32 %v1377, 23
    %v1379 = vsub.s32 %v1378, 127
    %v1380 = vand.u32 2147483647, %v644
    %v1381 = vand.u32 %v1380, 8388607
    %v1382 = vor.u32 %v1381, 8388608
    %v1383 = vsub.s32 0, %v1382
    %v1384 = vadd.s32 %v1379, 1
    %vm1385 = vcmp.gt.s32.totalorder %v1384, 0
    %v1386 = vsel %vm1385, %v1384, 0
    %v1387 = vshrl.u32 %v1386, 5
    %v1388 = vand.u32 %v1386, 31
    %v1389 = vsub.s32 32, %v1388
    %v1390 = vshrl.u32 683565275, %v1389
    %v1391 = vshll.u32 683565275, %v1388
    %v1392 = vshrl.u32 2475754826, %v1389
    %v1393 = vor.u32 %v1391, %v1392
    %v1394 = vshll.u32 2475754826, %v1388
    %v1395 = vshrl.u32 2131351028, %v1389
    %v1396 = vor.u32 %v1394, %v1395
    %v1397 = vshll.u32 2131351028, %v1388
    %v1398 = vshrl.u32 2102212464, %v1389
    %v1399 = vor.u32 %v1397, %v1398
    %v1400 = vshll.u32 2102212464, %v1388
    %v1401 = vshrl.u32 920167782, %v1389
    %v1402 = vor.u32 %v1400, %v1401
    %v1403 = vshll.u32 920167782, %v1388
    %v1404 = vshrl.u32 1326507024, %v1389
    %v1405 = vor.u32 %v1403, %v1404
    %vm1406 = vcmp.lt.s32.totalorder %v1387, 1
    %vm1407 = vcmp.lt.s32.totalorder %v1387, 2
    %vm1408 = vcmp.lt.s32.totalorder %v1387, 3
    %vm1409 = vcmp.lt.s32.totalorder %v1387, 4
    %v1410 = vsel %vm1406, %v1390, %v1393
    %v1411 = vsel %vm1409, %v1399, 2102212464
    %v1412 = vsel %vm1408, %v1396, %v1411
    %v1413 = vsel %vm1407, %v1410, %v1412
    %v1414 = vsel %vm1406, %v1393, %v1396
    %v1415 = vsel %vm1409, %v1402, 920167782
    %v1416 = vsel %vm1408, %v1399, %v1415
    %v1417 = vsel %vm1407, %v1414, %v1416
    %v1418 = vsel %vm1406, %v1396, %v1399
    %v1419 = vsel %vm1409, %v1405, 1326507024
    %v1420 = vsel %vm1408, %v1402, %v1419
    %v1421 = vsel %vm1407, %v1418, %v1420
    %v1422 = vshll.u32 %v1382, 8
    %v1423 = vmul.u32.u64.compose %v1422, %v1421
    %v1424 = vextract.low.u32 %v1423
    %v1425 = vextract.high.u32 %v1423
    %v1426 = vmul.u32.u64.compose %v1422, %v1417
    %v1427 = vextract.low.u32 %v1426
    %v1428 = vextract.high.u32 %v1426
    %v1429 = vmul.u32 %v1422, %v1413
    %v1430 = vadd.s32 %v1425, %v1427
    %vm1431 = vc.u32 %v1425, %v1427
    %v1432 = vadd.s32 %v1428, 1
    %v1433 = vsel %vm1431, %v1432, %v1428
    %v1434 = vadd.s32 %v1429, %v1433
    %v1435 = vadd.s32 %v1434, 536870912
    %v1436 = vshrl.u32 %v1435, 30
    %v1437 = vshll.u32 %v1436, 30
    %v1438 = vsub.s32 %v1434, %v1437
    %vm1439 = vcmp.lt.s32.totalorder %v1438, 0
    %v1440 = vsub.s32 0, %v1438
    %v1441 = vsel %vm1439, %v1440, %v1438
    %v1442 = vclz %v1441
    %v1443 = vsub.s32 %v1442, 2
    %vm1444 = vcmp.gt.s32.totalorder 0, %v1443
    %v1445 = vsel %vm1444, 0, %v1443
    %v1446 = vsub.s32 32, %v1445
    %v1447 = vshll.u32 %v1438, %v1445
    %v1448 = vshrl.u32 %v1430, %v1446
    %v1449 = vor.u32 %v1447, %v1448
    %v1450 = vsub.s32 4294967266, %v1445
    %v1451 = vadd.s32 %v1450, 127
    %v1452 = vshll.u32 %v1451, 23
    %v1453 = vor.u32 4788187, %v1452
    %v1454 = vand.u32 2147483647, %v1453
    %v1456 = vcvt.s32.f32 %v1449
    %v1457 = vmul.f32 %v1456, %v1454
    %v1458 = vxor.u32 %v1457, 2147483648
    %v1459 = vsel %vm1376, %v1458, %v1457
    %v1460 = vsub.s32 4, %v1436
    %v1461 = vsel %vm1376, %v1460, %v1436
    %v1462 = vsel %vm1375, %v644, %v1459
    %v1463 = vsel %vm1375, 0, %v1461
    %v1464 = vcosq.f32.pop %v1462
    %v1465 = vsinq.f32.pop %v1462
    %vm1466 = vweird.f32 %v644
    %v1467 = vadd.s32 %v1463, 3
    %v1468 = vand.u32 %v1467, 3
    %vm1469 = vcmp.lt.s32.totalorder %v1468, 2
    %vm1470 = vcmp.eq.s32.totalorder %v1468, 0
    %v1471 = vxor.u32 %v1465, 2147483648
    %v1472 = vsel %vm1470, %v1464, %v1471
    %vm1473 = vcmp.eq.s32.totalorder %v1468, 2
    %v1474 = vxor.u32 %v1464, 2147483648
    %v1475 = vsel %vm1473, %v1474, %v1465
    %v1476 = vsel %vm1469, %v1472, %v1475
    %v1477 = vsel %vm1466, nan, %v1476
    %v1478 = vld [vmem:[%s2] sm:$0xff]
    %v1479 = vld [vmem:[%s2 + $0x8] sm:$0xff]
    %v1480 = vld [vmem:[%s2 + $0x10] sm:$0xff]
    %v1481 = vld [vmem:[%s2 + $0x18] sm:$0xff]
    %1483 = vset.pattern.permute.xlu0 0
    %1484 = vperm.xlu0 %1483, %v1478
    %v1485 = vpop.permute.xlu0 %1484
    %1488 = vset.pattern.permute.xlu0 0
    %1489 = vperm.xlu0 %1488, %v1479
    %v1490 = vpop.permute.xlu0 %1489
    %1493 = vset.pattern.permute.xlu0 0
    %1494 = vperm.xlu0 %1493, %v1480
    %v1495 = vpop.permute.xlu0 %1494
    %1498 = vset.pattern.permute.xlu0 0
    %1499 = vperm.xlu0 %1498, %v1481
    %v1500 = vpop.permute.xlu0 %1499
    %v1502 = vlaneseq
    %v1503 = vshrl.u32 %v1502, 7
    %v1504 = vsub.s32 0, %v1503
    %v1505 = vrot.slane %v15, %v1504
    %v1506 = vlaneseq
    %v1507 = vshrl.u32 %v1506, 7
    %v1508 = vsub.s32 0, %v1507
    %v1509 = vrot.slane %v16, %v1508
    %v1510 = vmul.f32 %v1485, %v1505
    %v1511 = vmul.f32 %v1485, %v1509
    %v1512 = vmul.f32 %v1490, %v1505
    %v1513 = vmul.f32 %v1490, %v1509
    %v1514 = vmul.f32 %v1495, %v1505
    %v1515 = vmul.f32 %v1495, %v1509
    %v1516 = vmul.f32 %v1500, %v1505
    %v1517 = vmul.f32 %v1500, %v1509
    %1518 = vset.pattern.permute.xlu0 1
    %1519 = vperm.xlu0 %1518, %v1478
    %v1520 = vpop.permute.xlu0 %1519
    %1522 = vset.pattern.permute.xlu0 1
    %1523 = vperm.xlu0 %1522, %v1479
    %v1524 = vpop.permute.xlu0 %1523
    %1526 = vset.pattern.permute.xlu0 1
    %1527 = vperm.xlu0 %1526, %v1480
    %v1528 = vpop.permute.xlu0 %1527
    %1530 = vset.pattern.permute.xlu0 1
    %1531 = vperm.xlu0 %1530, %v1481
    %v1532 = vpop.permute.xlu0 %1531
    %v1534 = vlaneseq
    %v1535 = vshrl.u32 %v1534, 7
    %v1536 = vsub.s32 1, %v1535
    %v1537 = vrot.slane %v15, %v1536
    %v1538 = vlaneseq
    %v1539 = vshrl.u32 %v1538, 7
    %v1540 = vsub.s32 1, %v1539
    %v1541 = vrot.slane %v16, %v1540
    %v1542 = vmul.f32 %v1520, %v1537
    %v1543 = vmul.f32 %v1520, %v1541
    %v1544 = vmul.f32 %v1524, %v1537
    %v1545 = vmul.f32 %v1524, %v1541
    %v1546 = vmul.f32 %v1528, %v1537
    %v1547 = vmul.f32 %v1528, %v1541
    %v1548 = vmul.f32 %v1532, %v1537
    %v1549 = vmul.f32 %v1532, %v1541
    %v1550 = vadd.f32 %v1510, %v1542
    %v1551 = vadd.f32 %v1511, %v1543
    %v1552 = vadd.f32 %v1512, %v1544
    %v1553 = vadd.f32 %v1513, %v1545
    %v1554 = vadd.f32 %v1514, %v1546
    %v1555 = vadd.f32 %v1515, %v1547
    %v1556 = vadd.f32 %v1516, %v1548
    %v1557 = vadd.f32 %v1517, %v1549
    %1558 = vset.pattern.permute.xlu0 4
    %1559 = vperm.xlu0 %1558, %v1478
    %v1560 = vpop.permute.xlu0 %1559
    %1562 = vset.pattern.permute.xlu0 4
    %1563 = vperm.xlu0 %1562, %v1479
    %v1564 = vpop.permute.xlu0 %1563
    %1566 = vset.pattern.permute.xlu0 4
    %1567 = vperm.xlu0 %1566, %v1480
    %v1568 = vpop.permute.xlu0 %1567
    %1570 = vset.pattern.permute.xlu0 4
    %1571 = vperm.xlu0 %1570, %v1481
    %v1572 = vpop.permute.xlu0 %1571
    %v1574 = vsub.f32 %v1550, %v1560
    %v1575 = vsub.f32 %v1551, %v1560
    %v1576 = vsub.f32 %v1552, %v1564
    %v1577 = vsub.f32 %v1553, %v1564
    %v1578 = vsub.f32 %v1554, %v1568
    %v1579 = vsub.f32 %v1555, %v1568
    %v1580 = vsub.f32 %v1556, %v1572
    %v1581 = vsub.f32 %v1557, %v1572
    %1582 = vset.pattern.permute.xlu0 3
    %1583 = vperm.xlu0 %1582, %v1478
    %v1584 = vpop.permute.xlu0 %1583
    %1586 = vset.pattern.permute.xlu0 3
    %1587 = vperm.xlu0 %1586, %v1479
    %v1588 = vpop.permute.xlu0 %1587
    %1590 = vset.pattern.permute.xlu0 3
    %1591 = vperm.xlu0 %1590, %v1480
    %v1592 = vpop.permute.xlu0 %1591
    %1594 = vset.pattern.permute.xlu0 3
    %1595 = vperm.xlu0 %1594, %v1481
    %v1596 = vpop.permute.xlu0 %1595
    %v1598 = vmul.f32 %v1584, %v1537
    %v1599 = vmul.f32 %v1584, %v1541
    %v1600 = vmul.f32 %v1588, %v1537
    %v1601 = vmul.f32 %v1588, %v1541
    %v1602 = vmul.f32 %v1592, %v1537
    %v1603 = vmul.f32 %v1592, %v1541
    %v1604 = vmul.f32 %v1596, %v1537
    %v1605 = vmul.f32 %v1596, %v1541
    %1606 = vset.pattern.permute.xlu0 2
    %1607 = vperm.xlu0 %1606, %v1478
    %v1608 = vpop.permute.xlu0 %1607
    %1610 = vset.pattern.permute.xlu0 2
    %1611 = vperm.xlu0 %1610, %v1479
    %v1612 = vpop.permute.xlu0 %1611
    %1614 = vset.pattern.permute.xlu0 2
    %1615 = vperm.xlu0 %1614, %v1480
    %v1616 = vpop.permute.xlu0 %1615
    %1618 = vset.pattern.permute.xlu0 2
    %1619 = vperm.xlu0 %1618, %v1481
    %v1620 = vpop.permute.xlu0 %1619
    %v1622 = vmul.f32 %v1608, %v1505
    %v1623 = vmul.f32 %v1608, %v1509
    %v1624 = vmul.f32 %v1612, %v1505
    %v1625 = vmul.f32 %v1612, %v1509
    %v1626 = vmul.f32 %v1616, %v1505
    %v1627 = vmul.f32 %v1616, %v1509
    %v1628 = vmul.f32 %v1620, %v1505
    %v1629 = vmul.f32 %v1620, %v1509
    %v1630 = vsub.f32 %v1598, %v1622
    %v1631 = vsub.f32 %v1599, %v1623
    %v1632 = vsub.f32 %v1600, %v1624
    %v1633 = vsub.f32 %v1601, %v1625
    %v1634 = vsub.f32 %v1602, %v1626
    %v1635 = vsub.f32 %v1603, %v1627
    %v1636 = vsub.f32 %v1604, %v1628
    %v1637 = vsub.f32 %v1605, %v1629
    %1638 = vset.pattern.permute.xlu0 5
    %1639 = vperm.xlu0 %1638, %v1478
    %v1640 = vpop.permute.xlu0 %1639
    %1642 = vset.pattern.permute.xlu0 5
    %1643 = vperm.xlu0 %1642, %v1479
    %v1644 = vpop.permute.xlu0 %1643
    %1646 = vset.pattern.permute.xlu0 5
    %1647 = vperm.xlu0 %1646, %v1480
    %v1648 = vpop.permute.xlu0 %1647
    %1650 = vset.pattern.permute.xlu0 5
    %1651 = vperm.xlu0 %1650, %v1481
    %v1652 = vpop.permute.xlu0 %1651
    %v1654 = vsub.f32 %v1630, %v1640
    %v1655 = vsub.f32 %v1631, %v1640
    %v1656 = vsub.f32 %v1632, %v1644
    %v1657 = vsub.f32 %v1633, %v1644
    %v1658 = vsub.f32 %v1634, %v1648
    %v1659 = vsub.f32 %v1635, %v1648
    %v1660 = vsub.f32 %v1636, %v1652
    %v1661 = vsub.f32 %v1637, %v1652
    %v1662 = vmul.f32 %v1574, %v1574
    %v1663 = vmul.f32 %v1575, %v1575
    %v1664 = vmul.f32 %v1576, %v1576
    %v1665 = vmul.f32 %v1577, %v1577
    %v1666 = vmul.f32 %v1578, %v1578
    %v1667 = vmul.f32 %v1579, %v1579
    %v1668 = vmul.f32 %v1580, %v1580
    %v1669 = vmul.f32 %v1581, %v1581
    %v1670 = vmul.f32 %v1654, %v1654
    %v1671 = vmul.f32 %v1655, %v1655
    %v1672 = vmul.f32 %v1656, %v1656
    %v1673 = vmul.f32 %v1657, %v1657
    %v1674 = vmul.f32 %v1658, %v1658
    %v1675 = vmul.f32 %v1659, %v1659
    %v1676 = vmul.f32 %v1660, %v1660
    %v1677 = vmul.f32 %v1661, %v1661
    %v1678 = vadd.f32 %v1662, %v1670
    %v1679 = vadd.f32 %v1663, %v1671
    %v1680 = vadd.f32 %v1664, %v1672
    %v1681 = vadd.f32 %v1665, %v1673
    %v1682 = vadd.f32 %v1666, %v1674
    %v1683 = vadd.f32 %v1667, %v1675
    %v1684 = vadd.f32 %v1668, %v1676
    %v1685 = vadd.f32 %v1669, %v1677
    %v1686 = vsub.f32 0.0, %v1678
    %v1687 = vsub.f32 0.0, %v1679
    %v1688 = vsub.f32 0.0, %v1680
    %v1689 = vsub.f32 0.0, %v1681
    %v1690 = vsub.f32 0.0, %v1682
    %v1691 = vsub.f32 0.0, %v1683
    %v1692 = vsub.f32 0.0, %v1684
    %v1693 = vsub.f32 0.0, %v1685
    %v1694 = vpow.pop %v1686
    %v1695 = vpow.pop %v1687
    %v1696 = vpow.pop %v1688
    %v1697 = vpow.pop %v1689
    %v1698 = vpow.pop %v1690
    %v1699 = vpow.pop %v1691
    %v1700 = vpow.pop %v1692
    %v1701 = vpow.pop %v1693
    %v1702 = vmul.f32 %v1694, %v749
    %v1703 = vmul.f32 %v1695, %v853
    %v1704 = vmul.f32 %v1696, %v957
    %v1705 = vmul.f32 %v1697, %v1061
    %v1706 = vmul.f32 %v1698, %v1165
    %v1707 = vmul.f32 %v1699, %v1269
    %v1708 = vmul.f32 %v1700, %v1373
    %v1709 = vmul.f32 %v1701, %v1477
    %1710 = vst [vmem:[#allocation2] sm:$0xff] %v1702
    %1711 = vst [vmem:[#allocation2 + $0x8] sm:$0xff] %v1703
    %1712 = vst [vmem:[#allocation2 + $0x10] sm:$0xff] %v1704
    %1713 = vst [vmem:[#allocation2 + $0x18] sm:$0xff] %v1705
    %1714 = vst [vmem:[#allocation2 + $0x20] sm:$0xff] %v1706
    %1715 = vst [vmem:[#allocation2 + $0x28] sm:$0xff] %v1707
    %1716 = vst [vmem:[#allocation2 + $0x30] sm:$0xff] %v1708
    %1717 = vst [vmem:[#allocation2 + $0x38] sm:$0xff] %v1709
    // Predicated region
    $region14: #{tpu_custom_call.1} parent=1 // pred_check
      _
    $region15: #{tpu_custom_call.1} parent=1 // pred_check_branch
      %1719 = sbr.rel (0) target = $region17
    $region16: #{tpu_custom_call.1} parent=1 // pred_region
      %s1721 = ssub.s32 1024, 1024
      %1722 = vsyncadd [#allocation3], %s1721
      %s1723 = sshll.u32 [#allocation2], 4
      %s1724 = int_to_ptr.vmem [resolvable:$true] %s1723
      %1729 = dma.vmem_to_hbm [thread:$0]  %s1724, 1024, %s3, [#allocation3], 256, 256, 16
    $region17: #{tpu_custom_call.1} parent=1 // pred_fallthru
      _
    // Predicated region
    $region18: #{tpu_custom_call.1} parent=1 // pred_check
      _
    $region19: #{tpu_custom_call.1} parent=1 // pred_check_branch
      %1731 = sbr.rel (0) target = $region21
    $region20: #{tpu_custom_call.1} parent=1 // pred_region
      %1732 = dma.done [#allocation3], 1024
    $region21: #{tpu_custom_call.1} parent=1 // pred_fallthru
      _
    %1733 = vsyncpa [#allocation3], 1

</llo_original>
